<compile_context>
chip_gen: v5e
topology: v5e:2x2
jax: 0.10.0
libtpu: 0.0.40
codegen_flags: <defaults>
</compile_context>

<pallas_src>
import functools

import jax
import jax.numpy as jnp
from jax import lax
from jax.experimental import pallas as pl
from jax.experimental.pallas import tpu as pltpu


def _conv_bn_lif_kernel(x_ref, w_ref, thr_ref, out_ref, *, tile_co, K, T):
    """Fused 1xK time-conv + folded BN + Leaky-spike threshold for one tile.

    x_ref   : (1, C, T + K - 1)  VMEM, one batch element, time zero-padded
    w_ref   : (Cout, K)          SMEM, BN-scale-folded conv taps
    thr_ref : (Cout,)            SMEM, folded spike thresholds (1 - shift)
    out_ref : (1, tile_co, C, T) VMEM, binary spikes (NCHW slice)
    """
    x = x_ref[0]                                   # (C, Tp)
    xs = [x[:, k:k + T] for k in range(K)]         # K lane-shifted (C, T) slabs
    co_base = pl.program_id(1) * tile_co
    for c in range(tile_co):                       # static unroll over this Cout tile
        cg = co_base + c                           # global output channel
        acc = w_ref[cg, 0] * xs[0]
        for k in range(1, K):
            acc = acc + w_ref[cg, k] * xs[k]
        out_ref[0, c] = (acc > thr_ref[cg]).astype(out_ref.dtype)


def _pick_cout_tile(cout, c, t, itemsize, budget_bytes=2 * 1024 * 1024):
    """Largest divisor of Cout whose (tile, C, T) out block stays under budget."""
    best = 1
    for tc in range(1, cout + 1):
        if cout % tc == 0 and tc * c * t * itemsize <= budget_bytes:
            best = tc
    return best


def conv_encoder_forward(x, conv_w, conv_b, bn_gamma, bn_beta, bn_mean, bn_var,
                         eps=1e-5, out_dtype=jnp.float32):
    """x: (B, T, C) float32.  Returns spikes in NCHW layout (B, Cout, C, T).

    out_dtype: spikes are exactly 0/1, so bfloat16 (or int8) halves/quarters the
    HBM writeback on this mem-bound kernel; default float32 matches PyTorch.
    """
    B, T, C = x.shape
    Cout, _, _, K = conv_w.shape
    assert K % 2 == 1, "kernel_size assumed odd (SAME padding K//2)"
    P = K // 2
    Tp = T + 2 * P

    # Input-side glue (Cout-times smaller than the output traffic): permute to
    # (B, C, T) and zero-pad along time so the kernel only does aligned slabs.
    x_rows = jnp.transpose(x, (0, 2, 1)).astype(jnp.float32)          # (B, C, T)
    x_pad = jnp.pad(x_rows, ((0, 0), (0, 0), (P, P)))                 # (B, C, Tp)

    # Fold BN (eval) + conv bias:   y = scale*conv + shift ; spike = y > 1
    #   -> spike = (conv with w' = scale*w) > (1 - shift)
    scale = bn_gamma / jnp.sqrt(bn_var + eps)                         # (Cout,)
    w_folded = conv_w.reshape(Cout, K).astype(jnp.float32) * scale[:, None]
    shift = bn_beta - bn_mean * scale + scale * conv_b                # (Cout,)
    thr = (1.0 - shift).astype(jnp.float32)                           # (Cout,)

    tile_co = _pick_cout_tile(Cout, C, T, jnp.dtype(out_dtype).itemsize)
    kern = functools.partial(_conv_bn_lif_kernel, tile_co=tile_co, K=K, T=T)

    out = pl.pallas_call(
        kern,
        grid=(B, Cout // tile_co),
        in_specs=[
            pl.BlockSpec((1, C, Tp), lambda b, co: (b, 0, 0)),
            pl.BlockSpec(memory_space=pltpu.MemorySpace.SMEM),
            pl.BlockSpec(memory_space=pltpu.MemorySpace.SMEM),
        ],
        out_specs=pl.BlockSpec((1, tile_co, C, T), lambda b, co: (b, co, 0, 0)),
        out_shape=jax.ShapeDtypeStruct((B, Cout, C, T), out_dtype),
        compiler_params=pltpu.CompilerParams(
            dimension_semantics=("parallel", "parallel"),
            vmem_limit_bytes=32 * 1024 * 1024),
    )(x_pad, w_folded, thr)
    return out


def conv_encoder_reference(x, conv_w, conv_b, bn_gamma, bn_beta, bn_mean, bn_var,
                           eps=1e-5):
    """Pure-JAX reference mirroring the PyTorch module (eval-mode BN).

    Returns (pre_activation, spikes) in NCHW (B, Cout, C, T).
    """
    K = conv_w.shape[-1]
    P = K // 2
    inp = jnp.transpose(x, (0, 2, 1))[:, None, :, :]                  # (B, 1, C, T)
    conv = lax.conv_general_dilated(
        inp, conv_w, window_strides=(1, 1), padding=((0, 0), (P, P)),
        dimension_numbers=("NCHW", "OIHW", "NCHW"))
    conv = conv + conv_b[None, :, None, None]
    y = (conv - bn_mean[None, :, None, None]) / jnp.sqrt(
        bn_var + eps)[None, :, None, None]
    y = y * bn_gamma[None, :, None, None] + bn_beta[None, :, None, None]
    return y, (y > 1.0).astype(jnp.float32)


if __name__ == "__main__":
    # Small shapes consistent with the module: x is (batch, seq_len, features).
    # T chosen as a multiple of 128 so output stores are lane-dense.
    B, T, C = 2, 128, 4
    output_size, kernel_size = 32, 3

    key = jax.random.PRNGKey(0)
    kx, kw, kb, kg, kbeta, km, kv = jax.random.split(key, 7)

    x = jax.random.normal(kx, (B, T, C), dtype=jnp.float32)
    # Deterministic synthetic parameters (shapes from Conv2d / BatchNorm2d __init__).
    conv_w = jax.random.normal(kw, (output_size, 1, 1, kernel_size), jnp.float32) * 0.8
    conv_b = jax.random.normal(kb, (output_size,), jnp.float32) * 0.1
    bn_gamma = 1.0 + 0.1 * jax.random.normal(kg, (output_size,), jnp.float32)
    bn_beta = 0.1 * jax.random.normal(kbeta, (output_size,), jnp.float32)
    bn_mean = 0.1 * jax.random.normal(km, (output_size,), jnp.float32)
    bn_var = 1.0 + 0.1 * jax.random.uniform(kv, (output_size,), jnp.float32)

    spikes = conv_encoder_forward(x, conv_w, conv_b, bn_gamma, bn_beta,
                                  bn_mean, bn_var)
    spikes = jax.block_until_ready(spikes)

    y_ref, spk_ref = conv_encoder_reference(x, conv_w, conv_b, bn_gamma, bn_beta,
                                            bn_mean, bn_var)
    assert spikes.shape == (B, output_size, C, T), spikes.shape
    # Binary spikes: allow disagreement only where the pre-activation sits within
    # float-reassociation distance of the threshold (BN folding reorders the math).
    near_threshold = jnp.abs(y_ref - 1.0) < 1e-4
    ok = jnp.logical_or(spikes == spk_ref, near_threshold)
    assert bool(jnp.all(ok)), "Pallas kernel mismatch vs reference"

    print("KERNEL_OK")
</pallas_src>

<mosaic_0001>
module attributes {stable_mosaic.version = 11 : i64} {
  func.func @_conv_bn_lif_kernel(%arg0: i32, %arg1: i32, %arg2: memref<1x4x130xf32, #tpu.memory_space<vmem>>, %arg3: memref<32x3xf32, #tpu.memory_space<smem>>, %arg4: memref<32xf32, #tpu.memory_space<smem>>, %arg5: memref<1x32x4x128xf32, #tpu.memory_space<vmem>>) attributes {dimension_semantics = [#tpu.dimension_semantics<parallel>, #tpu.dimension_semantics<parallel>], iteration_bounds = array<i64: 2, 1>, scalar_prefetch = 0 : i64, scratch_operands = 0 : i64, tpu.core_type = #tpu.core_type<tc>, window_params = [{transform_indices = @transform_0, window_bounds = array<i64: 1, 4, 130>}, {transform_indices = @transform_1, window_bounds = array<i64: 32, 3>}, {transform_indices = @transform_2, window_bounds = array<i64: 32>}, {transform_indices = @transform_3, window_bounds = array<i64: 1, 32, 4, 128>}]} {
    %c0 = arith.constant 0 : index
    %c0_0 = arith.constant 0 : index
    %c0_1 = arith.constant 0 : index
    %0 = vector.load %arg2[%c0, %c0_0, %c0_1] : memref<1x4x130xf32, #tpu.memory_space<vmem>>, vector<1x4x130xf32>
    %1 = vector.shape_cast %0 : vector<1x4x130xf32> to vector<4x130xf32>
    %2 = vector.extract_strided_slice %1 {offsets = [0, 0], sizes = [4, 128], strides = [1, 1]} : vector<4x130xf32> to vector<4x128xf32>
    %3 = vector.extract_strided_slice %1 {offsets = [0, 1], sizes = [4, 128], strides = [1, 1]} : vector<4x130xf32> to vector<4x128xf32>
    %4 = vector.extract_strided_slice %1 {offsets = [0, 2], sizes = [4, 128], strides = [1, 1]} : vector<4x130xf32> to vector<4x128xf32>
    %c32_i32 = arith.constant 32 : i32
    %5 = arith.muli %arg1, %c32_i32 : i32
    %c0_i32 = arith.constant 0 : i32
    %6 = arith.addi %5, %c0_i32 : i32
    %7 = arith.index_cast %6 : i32 to index
    %c0_2 = arith.constant 0 : index
    %8 = memref.load %arg3[%7, %c0_2] : memref<32x3xf32, #tpu.memory_space<smem>>
    %9 = vector.broadcast %8 : f32 to vector<4x128xf32>
    %10 = arith.mulf %9, %2 : vector<4x128xf32>
    %11 = arith.index_cast %6 : i32 to index
    %c1 = arith.constant 1 : index
    %12 = memref.load %arg3[%11, %c1] : memref<32x3xf32, #tpu.memory_space<smem>>
    %13 = vector.broadcast %12 : f32 to vector<4x128xf32>
    %14 = arith.mulf %13, %3 : vector<4x128xf32>
    %15 = arith.addf %10, %14 : vector<4x128xf32>
    %16 = arith.index_cast %6 : i32 to index
    %c2 = arith.constant 2 : index
    %17 = memref.load %arg3[%16, %c2] : memref<32x3xf32, #tpu.memory_space<smem>>
    %18 = vector.broadcast %17 : f32 to vector<4x128xf32>
    %19 = arith.mulf %18, %4 : vector<4x128xf32>
    %20 = arith.addf %15, %19 : vector<4x128xf32>
    %21 = arith.index_cast %6 : i32 to index
    %22 = memref.load %arg4[%21] : memref<32xf32, #tpu.memory_space<smem>>
    %23 = vector.broadcast %22 : f32 to vector<4x128xf32>
    %24 = arith.cmpf ogt, %20, %23 : vector<4x128xf32>
    %25 = arith.extui %24 : vector<4x128xi1> to vector<4x128xi32>
    %26 = arith.sitofp %25 : vector<4x128xi32> to vector<4x128xf32>
    %c0_3 = arith.constant 0 : index
    %c0_4 = arith.constant 0 : index
    %c0_5 = arith.constant 0 : index
    %c0_6 = arith.constant 0 : index
    %27 = vector.load %arg5[%c0_3, %c0_4, %c0_5, %c0_6] : memref<1x32x4x128xf32, #tpu.memory_space<vmem>>, vector<1x1x4x128xf32>
    %28 = vector.shape_cast %27 : vector<1x1x4x128xf32> to vector<4x128xf32>
    %29 = vector.shape_cast %26 : vector<4x128xf32> to vector<1x1x4x128xf32>
    tpu.vector_store %arg5[%c0_3, %c0_4, %c0_5, %c0_6], %29 {strides = array<i32>} : memref<1x32x4x128xf32, #tpu.memory_space<vmem>>, vector<1x1x4x128xf32>,
    %c1_i32 = arith.constant 1 : i32
    %30 = arith.addi %5, %c1_i32 : i32
    %31 = arith.index_cast %30 : i32 to index
    %c0_7 = arith.constant 0 : index
    %32 = memref.load %arg3[%31, %c0_7] : memref<32x3xf32, #tpu.memory_space<smem>>
    %33 = vector.broadcast %32 : f32 to vector<4x128xf32>
    %34 = arith.mulf %33, %2 : vector<4x128xf32>
    %35 = arith.index_cast %30 : i32 to index
    %c1_8 = arith.constant 1 : index
    %36 = memref.load %arg3[%35, %c1_8] : memref<32x3xf32, #tpu.memory_space<smem>>
    %37 = vector.broadcast %36 : f32 to vector<4x128xf32>
    %38 = arith.mulf %37, %3 : vector<4x128xf32>
    %39 = arith.addf %34, %38 : vector<4x128xf32>
    %40 = arith.index_cast %30 : i32 to index
    %c2_9 = arith.constant 2 : index
    %41 = memref.load %arg3[%40, %c2_9] : memref<32x3xf32, #tpu.memory_space<smem>>
    %42 = vector.broadcast %41 : f32 to vector<4x128xf32>
    %43 = arith.mulf %42, %4 : vector<4x128xf32>
    %44 = arith.addf %39, %43 : vector<4x128xf32>
    %45 = arith.index_cast %30 : i32 to index
    %46 = memref.load %arg4[%45] : memref<32xf32, #tpu.memory_space<smem>>
    %47 = vector.broadcast %46 : f32 to vector<4x128xf32>
    %48 = arith.cmpf ogt, %44, %47 : vector<4x128xf32>
    %49 = arith.extui %48 : vector<4x128xi1> to vector<4x128xi32>
    %50 = arith.sitofp %49 : vector<4x128xi32> to vector<4x128xf32>
    %c0_10 = arith.constant 0 : index
    %c1_11 = arith.constant 1 : index
    %c0_12 = arith.constant 0 : index
    %c0_13 = arith.constant 0 : index
    %51 = vector.load %arg5[%c0_10, %c1_11, %c0_12, %c0_13] : memref<1x32x4x128xf32, #tpu.memory_space<vmem>>, vector<1x1x4x128xf32>
    %52 = vector.shape_cast %51 : vector<1x1x4x128xf32> to vector<4x128xf32>
    %53 = vector.shape_cast %50 : vector<4x128xf32> to vector<1x1x4x128xf32>
    tpu.vector_store %arg5[%c0_10, %c1_11, %c0_12, %c0_13], %53 {strides = array<i32>} : memref<1x32x4x128xf32, #tpu.memory_space<vmem>>, vector<1x1x4x128xf32>,
    %c2_i32 = arith.constant 2 : i32
    %54 = arith.addi %5, %c2_i32 : i32
    %55 = arith.index_cast %54 : i32 to index
    %c0_14 = arith.constant 0 : index
    %56 = memref.load %arg3[%55, %c0_14] : memref<32x3xf32, #tpu.memory_space<smem>>
    %57 = vector.broadcast %56 : f32 to vector<4x128xf32>
    %58 = arith.mulf %57, %2 : vector<4x128xf32>
    %59 = arith.index_cast %54 : i32 to index
    %c1_15 = arith.constant 1 : index
    %60 = memref.load %arg3[%59, %c1_15] : memref<32x3xf32, #tpu.memory_space<smem>>
    %61 = vector.broadcast %60 : f32 to vector<4x128xf32>
    %62 = arith.mulf %61, %3 : vector<4x128xf32>
    %63 = arith.addf %58, %62 : vector<4x128xf32>
    %64 = arith.index_cast %54 : i32 to index
    %c2_16 = arith.constant 2 : index
    %65 = memref.load %arg3[%64, %c2_16] : memref<32x3xf32, #tpu.memory_space<smem>>
    %66 = vector.broadcast %65 : f32 to vector<4x128xf32>
    %67 = arith.mulf %66, %4 : vector<4x128xf32>
    %68 = arith.addf %63, %67 : vector<4x128xf32>
    %69 = arith.index_cast %54 : i32 to index
    %70 = memref.load %arg4[%69] : memref<32xf32, #tpu.memory_space<smem>>
    %71 = vector.broadcast %70 : f32 to vector<4x128xf32>
    %72 = arith.cmpf ogt, %68, %71 : vector<4x128xf32>
    %73 = arith.extui %72 : vector<4x128xi1> to vector<4x128xi32>
    %74 = arith.sitofp %73 : vector<4x128xi32> to vector<4x128xf32>
    %c0_17 = arith.constant 0 : index
    %c2_18 = arith.constant 2 : index
    %c0_19 = arith.constant 0 : index
    %c0_20 = arith.constant 0 : index
    %75 = vector.load %arg5[%c0_17, %c2_18, %c0_19, %c0_20] : memref<1x32x4x128xf32, #tpu.memory_space<vmem>>, vector<1x1x4x128xf32>
    %76 = vector.shape_cast %75 : vector<1x1x4x128xf32> to vector<4x128xf32>
    %77 = vector.shape_cast %74 : vector<4x128xf32> to vector<1x1x4x128xf32>
    tpu.vector_store %arg5[%c0_17, %c2_18, %c0_19, %c0_20], %77 {strides = array<i32>} : memref<1x32x4x128xf32, #tpu.memory_space<vmem>>, vector<1x1x4x128xf32>,
    %c3_i32 = arith.constant 3 : i32
    %78 = arith.addi %5, %c3_i32 : i32
    %79 = arith.index_cast %78 : i32 to index
    %c0_21 = arith.constant 0 : index
    %80 = memref.load %arg3[%79, %c0_21] : memref<32x3xf32, #tpu.memory_space<smem>>
    %81 = vector.broadcast %80 : f32 to vector<4x128xf32>
    %82 = arith.mulf %81, %2 : vector<4x128xf32>
    %83 = arith.index_cast %78 : i32 to index
    %c1_22 = arith.constant 1 : index
    %84 = memref.load %arg3[%83, %c1_22] : memref<32x3xf32, #tpu.memory_space<smem>>
    %85 = vector.broadcast %84 : f32 to vector<4x128xf32>
    %86 = arith.mulf %85, %3 : vector<4x128xf32>
    %87 = arith.addf %82, %86 : vector<4x128xf32>
    %88 = arith.index_cast %78 : i32 to index
    %c2_23 = arith.constant 2 : index
    %89 = memref.load %arg3[%88, %c2_23] : memref<32x3xf32, #tpu.memory_space<smem>>
    %90 = vector.broadcast %89 : f32 to vector<4x128xf32>
    %91 = arith.mulf %90, %4 : vector<4x128xf32>
    %92 = arith.addf %87, %91 : vector<4x128xf32>
    %93 = arith.index_cast %78 : i32 to index
    %94 = memref.load %arg4[%93] : memref<32xf32, #tpu.memory_space<smem>>
    %95 = vector.broadcast %94 : f32 to vector<4x128xf32>
    %96 = arith.cmpf ogt, %92, %95 : vector<4x128xf32>
    %97 = arith.extui %96 : vector<4x128xi1> to vector<4x128xi32>
    %98 = arith.sitofp %97 : vector<4x128xi32> to vector<4x128xf32>
    %c0_24 = arith.constant 0 : index
    %c3 = arith.constant 3 : index
    %c0_25 = arith.constant 0 : index
    %c0_26 = arith.constant 0 : index
    %99 = vector.load %arg5[%c0_24, %c3, %c0_25, %c0_26] : memref<1x32x4x128xf32, #tpu.memory_space<vmem>>, vector<1x1x4x128xf32>
    %100 = vector.shape_cast %99 : vector<1x1x4x128xf32> to vector<4x128xf32>
    %101 = vector.shape_cast %98 : vector<4x128xf32> to vector<1x1x4x128xf32>
    tpu.vector_store %arg5[%c0_24, %c3, %c0_25, %c0_26], %101 {strides = array<i32>} : memref<1x32x4x128xf32, #tpu.memory_space<vmem>>, vector<1x1x4x128xf32>,
    %c4_i32 = arith.constant 4 : i32
    %102 = arith.addi %5, %c4_i32 : i32
    %103 = arith.index_cast %102 : i32 to index
    %c0_27 = arith.constant 0 : index
    %104 = memref.load %arg3[%103, %c0_27] : memref<32x3xf32, #tpu.memory_space<smem>>
    %105 = vector.broadcast %104 : f32 to vector<4x128xf32>
    %106 = arith.mulf %105, %2 : vector<4x128xf32>
    %107 = arith.index_cast %102 : i32 to index
    %c1_28 = arith.constant 1 : index
    %108 = memref.load %arg3[%107, %c1_28] : memref<32x3xf32, #tpu.memory_space<smem>>
    %109 = vector.broadcast %108 : f32 to vector<4x128xf32>
    %110 = arith.mulf %109, %3 : vector<4x128xf32>
    %111 = arith.addf %106, %110 : vector<4x128xf32>
    %112 = arith.index_cast %102 : i32 to index
    %c2_29 = arith.constant 2 : index
    %113 = memref.load %arg3[%112, %c2_29] : memref<32x3xf32, #tpu.memory_space<smem>>
    %114 = vector.broadcast %113 : f32 to vector<4x128xf32>
    %115 = arith.mulf %114, %4 : vector<4x128xf32>
    %116 = arith.addf %111, %115 : vector<4x128xf32>
    %117 = arith.index_cast %102 : i32 to index
    %118 = memref.load %arg4[%117] : memref<32xf32, #tpu.memory_space<smem>>
    %119 = vector.broadcast %118 : f32 to vector<4x128xf32>
    %120 = arith.cmpf ogt, %116, %119 : vector<4x128xf32>
    %121 = arith.extui %120 : vector<4x128xi1> to vector<4x128xi32>
    %122 = arith.sitofp %121 : vector<4x128xi32> to vector<4x128xf32>
    %c0_30 = arith.constant 0 : index
    %c4 = arith.constant 4 : index
    %c0_31 = arith.constant 0 : index
    %c0_32 = arith.constant 0 : index
    %123 = vector.load %arg5[%c0_30, %c4, %c0_31, %c0_32] : memref<1x32x4x128xf32, #tpu.memory_space<vmem>>, vector<1x1x4x128xf32>
    %124 = vector.shape_cast %123 : vector<1x1x4x128xf32> to vector<4x128xf32>
    %125 = vector.shape_cast %122 : vector<4x128xf32> to vector<1x1x4x128xf32>
    tpu.vector_store %arg5[%c0_30, %c4, %c0_31, %c0_32], %125 {strides = array<i32>} : memref<1x32x4x128xf32, #tpu.memory_space<vmem>>, vector<1x1x4x128xf32>,
    %c5_i32 = arith.constant 5 : i32
    %126 = arith.addi %5, %c5_i32 : i32
    %127 = arith.index_cast %126 : i32 to index
    %c0_33 = arith.constant 0 : index
    %128 = memref.load %arg3[%127, %c0_33] : memref<32x3xf32, #tpu.memory_space<smem>>
    %129 = vector.broadcast %128 : f32 to vector<4x128xf32>
    %130 = arith.mulf %129, %2 : vector<4x128xf32>
    %131 = arith.index_cast %126 : i32 to index
    %c1_34 = arith.constant 1 : index
    %132 = memref.load %arg3[%131, %c1_34] : memref<32x3xf32, #tpu.memory_space<smem>>
    %133 = vector.broadcast %132 : f32 to vector<4x128xf32>
    %134 = arith.mulf %133, %3 : vector<4x128xf32>
    %135 = arith.addf %130, %134 : vector<4x128xf32>
    %136 = arith.index_cast %126 : i32 to index
    %c2_35 = arith.constant 2 : index
    %137 = memref.load %arg3[%136, %c2_35] : memref<32x3xf32, #tpu.memory_space<smem>>
    %138 = vector.broadcast %137 : f32 to vector<4x128xf32>
    %139 = arith.mulf %138, %4 : vector<4x128xf32>
    %140 = arith.addf %135, %139 : vector<4x128xf32>
    %141 = arith.index_cast %126 : i32 to index
    %142 = memref.load %arg4[%141] : memref<32xf32, #tpu.memory_space<smem>>
    %143 = vector.broadcast %142 : f32 to vector<4x128xf32>
    %144 = arith.cmpf ogt, %140, %143 : vector<4x128xf32>
    %145 = arith.extui %144 : vector<4x128xi1> to vector<4x128xi32>
    %146 = arith.sitofp %145 : vector<4x128xi32> to vector<4x128xf32>
    %c0_36 = arith.constant 0 : index
    %c5 = arith.constant 5 : index
    %c0_37 = arith.constant 0 : index
    %c0_38 = arith.constant 0 : index
    %147 = vector.load %arg5[%c0_36, %c5, %c0_37, %c0_38] : memref<1x32x4x128xf32, #tpu.memory_space<vmem>>, vector<1x1x4x128xf32>
    %148 = vector.shape_cast %147 : vector<1x1x4x128xf32> to vector<4x128xf32>
    %149 = vector.shape_cast %146 : vector<4x128xf32> to vector<1x1x4x128xf32>
    tpu.vector_store %arg5[%c0_36, %c5, %c0_37, %c0_38], %149 {strides = array<i32>} : memref<1x32x4x128xf32, #tpu.memory_space<vmem>>, vector<1x1x4x128xf32>,
    %c6_i32 = arith.constant 6 : i32
    %150 = arith.addi %5, %c6_i32 : i32
    %151 = arith.index_cast %150 : i32 to index
    %c0_39 = arith.constant 0 : index
    %152 = memref.load %arg3[%151, %c0_39] : memref<32x3xf32, #tpu.memory_space<smem>>
    %153 = vector.broadcast %152 : f32 to vector<4x128xf32>
    %154 = arith.mulf %153, %2 : vector<4x128xf32>
    %155 = arith.index_cast %150 : i32 to index
    %c1_40 = arith.constant 1 : index
    %156 = memref.load %arg3[%155, %c1_40] : memref<32x3xf32, #tpu.memory_space<smem>>
    %157 = vector.broadcast %156 : f32 to vector<4x128xf32>
    %158 = arith.mulf %157, %3 : vector<4x128xf32>
    %159 = arith.addf %154, %158 : vector<4x128xf32>
    %160 = arith.index_cast %150 : i32 to index
    %c2_41 = arith.constant 2 : index
    %161 = memref.load %arg3[%160, %c2_41] : memref<32x3xf32, #tpu.memory_space<smem>>
    %162 = vector.broadcast %161 : f32 to vector<4x128xf32>
    %163 = arith.mulf %162, %4 : vector<4x128xf32>
    %164 = arith.addf %159, %163 : vector<4x128xf32>
    %165 = arith.index_cast %150 : i32 to index
    %166 = memref.load %arg4[%165] : memref<32xf32, #tpu.memory_space<smem>>
    %167 = vector.broadcast %166 : f32 to vector<4x128xf32>
    %168 = arith.cmpf ogt, %164, %167 : vector<4x128xf32>
    %169 = arith.extui %168 : vector<4x128xi1> to vector<4x128xi32>
    %170 = arith.sitofp %169 : vector<4x128xi32> to vector<4x128xf32>
    %c0_42 = arith.constant 0 : index
    %c6 = arith.constant 6 : index
    %c0_43 = arith.constant 0 : index
    %c0_44 = arith.constant 0 : index
    %171 = vector.load %arg5[%c0_42, %c6, %c0_43, %c0_44] : memref<1x32x4x128xf32, #tpu.memory_space<vmem>>, vector<1x1x4x128xf32>
    %172 = vector.shape_cast %171 : vector<1x1x4x128xf32> to vector<4x128xf32>
    %173 = vector.shape_cast %170 : vector<4x128xf32> to vector<1x1x4x128xf32>
    tpu.vector_store %arg5[%c0_42, %c6, %c0_43, %c0_44], %173 {strides = array<i32>} : memref<1x32x4x128xf32, #tpu.memory_space<vmem>>, vector<1x1x4x128xf32>,
    %c7_i32 = arith.constant 7 : i32
    %174 = arith.addi %5, %c7_i32 : i32
    %175 = arith.index_cast %174 : i32 to index
    %c0_45 = arith.constant 0 : index
    %176 = memref.load %arg3[%175, %c0_45] : memref<32x3xf32, #tpu.memory_space<smem>>
    %177 = vector.broadcast %176 : f32 to vector<4x128xf32>
    %178 = arith.mulf %177, %2 : vector<4x128xf32>
    %179 = arith.index_cast %174 : i32 to index
    %c1_46 = arith.constant 1 : index
    %180 = memref.load %arg3[%179, %c1_46] : memref<32x3xf32, #tpu.memory_space<smem>>
    %181 = vector.broadcast %180 : f32 to vector<4x128xf32>
    %182 = arith.mulf %181, %3 : vector<4x128xf32>
    %183 = arith.addf %178, %182 : vector<4x128xf32>
    %184 = arith.index_cast %174 : i32 to index
    %c2_47 = arith.constant 2 : index
    %185 = memref.load %arg3[%184, %c2_47] : memref<32x3xf32, #tpu.memory_space<smem>>
    %186 = vector.broadcast %185 : f32 to vector<4x128xf32>
    %187 = arith.mulf %186, %4 : vector<4x128xf32>
    %188 = arith.addf %183, %187 : vector<4x128xf32>
    %189 = arith.index_cast %174 : i32 to index
    %190 = memref.load %arg4[%189] : memref<32xf32, #tpu.memory_space<smem>>
    %191 = vector.broadcast %190 : f32 to vector<4x128xf32>
    %192 = arith.cmpf ogt, %188, %191 : vector<4x128xf32>
    %193 = arith.extui %192 : vector<4x128xi1> to vector<4x128xi32>
    %194 = arith.sitofp %193 : vector<4x128xi32> to vector<4x128xf32>
    %c0_48 = arith.constant 0 : index
    %c7 = arith.constant 7 : index
    %c0_49 = arith.constant 0 : index
    %c0_50 = arith.constant 0 : index
    %195 = vector.load %arg5[%c0_48, %c7, %c0_49, %c0_50] : memref<1x32x4x128xf32, #tpu.memory_space<vmem>>, vector<1x1x4x128xf32>
    %196 = vector.shape_cast %195 : vector<1x1x4x128xf32> to vector<4x128xf32>
    %197 = vector.shape_cast %194 : vector<4x128xf32> to vector<1x1x4x128xf32>
    tpu.vector_store %arg5[%c0_48, %c7, %c0_49, %c0_50], %197 {strides = array<i32>} : memref<1x32x4x128xf32, #tpu.memory_space<vmem>>, vector<1x1x4x128xf32>,
    %c8_i32 = arith.constant 8 : i32
    %198 = arith.addi %5, %c8_i32 : i32
    %199 = arith.index_cast %198 : i32 to index
    %c0_51 = arith.constant 0 : index
    %200 = memref.load %arg3[%199, %c0_51] : memref<32x3xf32, #tpu.memory_space<smem>>
    %201 = vector.broadcast %200 : f32 to vector<4x128xf32>
    %202 = arith.mulf %201, %2 : vector<4x128xf32>
    %203 = arith.index_cast %198 : i32 to index
    %c1_52 = arith.constant 1 : index
    %204 = memref.load %arg3[%203, %c1_52] : memref<32x3xf32, #tpu.memory_space<smem>>
    %205 = vector.broadcast %204 : f32 to vector<4x128xf32>
    %206 = arith.mulf %205, %3 : vector<4x128xf32>
    %207 = arith.addf %202, %206 : vector<4x128xf32>
    %208 = arith.index_cast %198 : i32 to index
    %c2_53 = arith.constant 2 : index
    %209 = memref.load %arg3[%208, %c2_53] : memref<32x3xf32, #tpu.memory_space<smem>>
    %210 = vector.broadcast %209 : f32 to vector<4x128xf32>
    %211 = arith.mulf %210, %4 : vector<4x128xf32>
    %212 = arith.addf %207, %211 : vector<4x128xf32>
    %213 = arith.index_cast %198 : i32 to index
    %214 = memref.load %arg4[%213] : memref<32xf32, #tpu.memory_space<smem>>
    %215 = vector.broadcast %214 : f32 to vector<4x128xf32>
    %216 = arith.cmpf ogt, %212, %215 : vector<4x128xf32>
    %217 = arith.extui %216 : vector<4x128xi1> to vector<4x128xi32>
    %218 = arith.sitofp %217 : vector<4x128xi32> to vector<4x128xf32>
    %c0_54 = arith.constant 0 : index
    %c8 = arith.constant 8 : index
    %c0_55 = arith.constant 0 : index
    %c0_56 = arith.constant 0 : index
    %219 = vector.load %arg5[%c0_54, %c8, %c0_55, %c0_56] : memref<1x32x4x128xf32, #tpu.memory_space<vmem>>, vector<1x1x4x128xf32>
    %220 = vector.shape_cast %219 : vector<1x1x4x128xf32> to vector<4x128xf32>
    %221 = vector.shape_cast %218 : vector<4x128xf32> to vector<1x1x4x128xf32>
    tpu.vector_store %arg5[%c0_54, %c8, %c0_55, %c0_56], %221 {strides = array<i32>} : memref<1x32x4x128xf32, #tpu.memory_space<vmem>>, vector<1x1x4x128xf32>,
    %c9_i32 = arith.constant 9 : i32
    %222 = arith.addi %5, %c9_i32 : i32
    %223 = arith.index_cast %222 : i32 to index
    %c0_57 = arith.constant 0 : index
    %224 = memref.load %arg3[%223, %c0_57] : memref<32x3xf32, #tpu.memory_space<smem>>
    %225 = vector.broadcast %224 : f32 to vector<4x128xf32>
    %226 = arith.mulf %225, %2 : vector<4x128xf32>
    %227 = arith.index_cast %222 : i32 to index
    %c1_58 = arith.constant 1 : index
    %228 = memref.load %arg3[%227, %c1_58] : memref<32x3xf32, #tpu.memory_space<smem>>
    %229 = vector.broadcast %228 : f32 to vector<4x128xf32>
    %230 = arith.mulf %229, %3 : vector<4x128xf32>
    %231 = arith.addf %226, %230 : vector<4x128xf32>
    %232 = arith.index_cast %222 : i32 to index
    %c2_59 = arith.constant 2 : index
    %233 = memref.load %arg3[%232, %c2_59] : memref<32x3xf32, #tpu.memory_space<smem>>
    %234 = vector.broadcast %233 : f32 to vector<4x128xf32>
    %235 = arith.mulf %234, %4 : vector<4x128xf32>
    %236 = arith.addf %231, %235 : vector<4x128xf32>
    %237 = arith.index_cast %222 : i32 to index
    %238 = memref.load %arg4[%237] : memref<32xf32, #tpu.memory_space<smem>>
    %239 = vector.broadcast %238 : f32 to vector<4x128xf32>
    %240 = arith.cmpf ogt, %236, %239 : vector<4x128xf32>
    %241 = arith.extui %240 : vector<4x128xi1> to vector<4x128xi32>
    %242 = arith.sitofp %241 : vector<4x128xi32> to vector<4x128xf32>
    %c0_60 = arith.constant 0 : index
    %c9 = arith.constant 9 : index
    %c0_61 = arith.constant 0 : index
    %c0_62 = arith.constant 0 : index
    %243 = vector.load %arg5[%c0_60, %c9, %c0_61, %c0_62] : memref<1x32x4x128xf32, #tpu.memory_space<vmem>>, vector<1x1x4x128xf32>
    %244 = vector.shape_cast %243 : vector<1x1x4x128xf32> to vector<4x128xf32>
    %245 = vector.shape_cast %242 : vector<4x128xf32> to vector<1x1x4x128xf32>
    tpu.vector_store %arg5[%c0_60, %c9, %c0_61, %c0_62], %245 {strides = array<i32>} : memref<1x32x4x128xf32, #tpu.memory_space<vmem>>, vector<1x1x4x128xf32>,
    %c10_i32 = arith.constant 10 : i32
    %246 = arith.addi %5, %c10_i32 : i32
    %247 = arith.index_cast %246 : i32 to index
    %c0_63 = arith.constant 0 : index
    %248 = memref.load %arg3[%247, %c0_63] : memref<32x3xf32, #tpu.memory_space<smem>>
    %249 = vector.broadcast %248 : f32 to vector<4x128xf32>
    %250 = arith.mulf %249, %2 : vector<4x128xf32>
    %251 = arith.index_cast %246 : i32 to index
    %c1_64 = arith.constant 1 : index
    %252 = memref.load %arg3[%251, %c1_64] : memref<32x3xf32, #tpu.memory_space<smem>>
    %253 = vector.broadcast %252 : f32 to vector<4x128xf32>
    %254 = arith.mulf %253, %3 : vector<4x128xf32>
    %255 = arith.addf %250, %254 : vector<4x128xf32>
    %256 = arith.index_cast %246 : i32 to index
    %c2_65 = arith.constant 2 : index
    %257 = memref.load %arg3[%256, %c2_65] : memref<32x3xf32, #tpu.memory_space<smem>>
    %258 = vector.broadcast %257 : f32 to vector<4x128xf32>
    %259 = arith.mulf %258, %4 : vector<4x128xf32>
    %260 = arith.addf %255, %259 : vector<4x128xf32>
    %261 = arith.index_cast %246 : i32 to index
    %262 = memref.load %arg4[%261] : memref<32xf32, #tpu.memory_space<smem>>
    %263 = vector.broadcast %262 : f32 to vector<4x128xf32>
    %264 = arith.cmpf ogt, %260, %263 : vector<4x128xf32>
    %265 = arith.extui %264 : vector<4x128xi1> to vector<4x128xi32>
    %266 = arith.sitofp %265 : vector<4x128xi32> to vector<4x128xf32>
    %c0_66 = arith.constant 0 : index
    %c10 = arith.constant 10 : index
    %c0_67 = arith.constant 0 : index
    %c0_68 = arith.constant 0 : index
    %267 = vector.load %arg5[%c0_66, %c10, %c0_67, %c0_68] : memref<1x32x4x128xf32, #tpu.memory_space<vmem>>, vector<1x1x4x128xf32>
    %268 = vector.shape_cast %267 : vector<1x1x4x128xf32> to vector<4x128xf32>
    %269 = vector.shape_cast %266 : vector<4x128xf32> to vector<1x1x4x128xf32>
    tpu.vector_store %arg5[%c0_66, %c10, %c0_67, %c0_68], %269 {strides = array<i32>} : memref<1x32x4x128xf32, #tpu.memory_space<vmem>>, vector<1x1x4x128xf32>,
    %c11_i32 = arith.constant 11 : i32
    %270 = arith.addi %5, %c11_i32 : i32
    %271 = arith.index_cast %270 : i32 to index
    %c0_69 = arith.constant 0 : index
    %272 = memref.load %arg3[%271, %c0_69] : memref<32x3xf32, #tpu.memory_space<smem>>
    %273 = vector.broadcast %272 : f32 to vector<4x128xf32>
    %274 = arith.mulf %273, %2 : vector<4x128xf32>
    %275 = arith.index_cast %270 : i32 to index
    %c1_70 = arith.constant 1 : index
    %276 = memref.load %arg3[%275, %c1_70] : memref<32x3xf32, #tpu.memory_space<smem>>
    %277 = vector.broadcast %276 : f32 to vector<4x128xf32>
    %278 = arith.mulf %277, %3 : vector<4x128xf32>
    %279 = arith.addf %274, %278 : vector<4x128xf32>
    %280 = arith.index_cast %270 : i32 to index
    %c2_71 = arith.constant 2 : index
    %281 = memref.load %arg3[%280, %c2_71] : memref<32x3xf32, #tpu.memory_space<smem>>
    %282 = vector.broadcast %281 : f32 to vector<4x128xf32>
    %283 = arith.mulf %282, %4 : vector<4x128xf32>
    %284 = arith.addf %279, %283 : vector<4x128xf32>
    %285 = arith.index_cast %270 : i32 to index
    %286 = memref.load %arg4[%285] : memref<32xf32, #tpu.memory_space<smem>>
    %287 = vector.broadcast %286 : f32 to vector<4x128xf32>
    %288 = arith.cmpf ogt, %284, %287 : vector<4x128xf32>
    %289 = arith.extui %288 : vector<4x128xi1> to vector<4x128xi32>
    %290 = arith.sitofp %289 : vector<4x128xi32> to vector<4x128xf32>
    %c0_72 = arith.constant 0 : index
    %c11 = arith.constant 11 : index
    %c0_73 = arith.constant 0 : index
    %c0_74 = arith.constant 0 : index
    %291 = vector.load %arg5[%c0_72, %c11, %c0_73, %c0_74] : memref<1x32x4x128xf32, #tpu.memory_space<vmem>>, vector<1x1x4x128xf32>
    %292 = vector.shape_cast %291 : vector<1x1x4x128xf32> to vector<4x128xf32>
    %293 = vector.shape_cast %290 : vector<4x128xf32> to vector<1x1x4x128xf32>
    tpu.vector_store %arg5[%c0_72, %c11, %c0_73, %c0_74], %293 {strides = array<i32>} : memref<1x32x4x128xf32, #tpu.memory_space<vmem>>, vector<1x1x4x128xf32>,
    %c12_i32 = arith.constant 12 : i32
    %294 = arith.addi %5, %c12_i32 : i32
    %295 = arith.index_cast %294 : i32 to index
    %c0_75 = arith.constant 0 : index
    %296 = memref.load %arg3[%295, %c0_75] : memref<32x3xf32, #tpu.memory_space<smem>>
    %297 = vector.broadcast %296 : f32 to vector<4x128xf32>
    %298 = arith.mulf %297, %2 : vector<4x128xf32>
    %299 = arith.index_cast %294 : i32 to index
    %c1_76 = arith.constant 1 : index
    %300 = memref.load %arg3[%299, %c1_76] : memref<32x3xf32, #tpu.memory_space<smem>>
    %301 = vector.broadcast %300 : f32 to vector<4x128xf32>
    %302 = arith.mulf %301, %3 : vector<4x128xf32>
    %303 = arith.addf %298, %302 : vector<4x128xf32>
    %304 = arith.index_cast %294 : i32 to index
    %c2_77 = arith.constant 2 : index
    %305 = memref.load %arg3[%304, %c2_77] : memref<32x3xf32, #tpu.memory_space<smem>>
    %306 = vector.broadcast %305 : f32 to vector<4x128xf32>
    %307 = arith.mulf %306, %4 : vector<4x128xf32>
    %308 = arith.addf %303, %307 : vector<4x128xf32>
    %309 = arith.index_cast %294 : i32 to index
    %310 = memref.load %arg4[%309] : memref<32xf32, #tpu.memory_space<smem>>
    %311 = vector.broadcast %310 : f32 to vector<4x128xf32>
    %312 = arith.cmpf ogt, %308, %311 : vector<4x128xf32>
    %313 = arith.extui %312 : vector<4x128xi1> to vector<4x128xi32>
    %314 = arith.sitofp %313 : vector<4x128xi32> to vector<4x128xf32>
    %c0_78 = arith.constant 0 : index
    %c12 = arith.constant 12 : index
    %c0_79 = arith.constant 0 : index
    %c0_80 = arith.constant 0 : index
    %315 = vector.load %arg5[%c0_78, %c12, %c0_79, %c0_80] : memref<1x32x4x128xf32, #tpu.memory_space<vmem>>, vector<1x1x4x128xf32>
    %316 = vector.shape_cast %315 : vector<1x1x4x128xf32> to vector<4x128xf32>
    %317 = vector.shape_cast %314 : vector<4x128xf32> to vector<1x1x4x128xf32>
    tpu.vector_store %arg5[%c0_78, %c12, %c0_79, %c0_80], %317 {strides = array<i32>} : memref<1x32x4x128xf32, #tpu.memory_space<vmem>>, vector<1x1x4x128xf32>,
    %c13_i32 = arith.constant 13 : i32
    %318 = arith.addi %5, %c13_i32 : i32
    %319 = arith.index_cast %318 : i32 to index
    %c0_81 = arith.constant 0 : index
    %320 = memref.load %arg3[%319, %c0_81] : memref<32x3xf32, #tpu.memory_space<smem>>
    %321 = vector.broadcast %320 : f32 to vector<4x128xf32>
    %322 = arith.mulf %321, %2 : vector<4x128xf32>
    %323 = arith.index_cast %318 : i32 to index
    %c1_82 = arith.constant 1 : index
    %324 = memref.load %arg3[%323, %c1_82] : memref<32x3xf32, #tpu.memory_space<smem>>
    %325 = vector.broadcast %324 : f32 to vector<4x128xf32>
    %326 = arith.mulf %325, %3 : vector<4x128xf32>
    %327 = arith.addf %322, %326 : vector<4x128xf32>
    %328 = arith.index_cast %318 : i32 to index
    %c2_83 = arith.constant 2 : index
    %329 = memref.load %arg3[%328, %c2_83] : memref<32x3xf32, #tpu.memory_space<smem>>
    %330 = vector.broadcast %329 : f32 to vector<4x128xf32>
    %331 = arith.mulf %330, %4 : vector<4x128xf32>
    %332 = arith.addf %327, %331 : vector<4x128xf32>
    %333 = arith.index_cast %318 : i32 to index
    %334 = memref.load %arg4[%333] : memref<32xf32, #tpu.memory_space<smem>>
    %335 = vector.broadcast %334 : f32 to vector<4x128xf32>
    %336 = arith.cmpf ogt, %332, %335 : vector<4x128xf32>
    %337 = arith.extui %336 : vector<4x128xi1> to vector<4x128xi32>
    %338 = arith.sitofp %337 : vector<4x128xi32> to vector<4x128xf32>
    %c0_84 = arith.constant 0 : index
    %c13 = arith.constant 13 : index
    %c0_85 = arith.constant 0 : index
    %c0_86 = arith.constant 0 : index
    %339 = vector.load %arg5[%c0_84, %c13, %c0_85, %c0_86] : memref<1x32x4x128xf32, #tpu.memory_space<vmem>>, vector<1x1x4x128xf32>
    %340 = vector.shape_cast %339 : vector<1x1x4x128xf32> to vector<4x128xf32>
    %341 = vector.shape_cast %338 : vector<4x128xf32> to vector<1x1x4x128xf32>
    tpu.vector_store %arg5[%c0_84, %c13, %c0_85, %c0_86], %341 {strides = array<i32>} : memref<1x32x4x128xf32, #tpu.memory_space<vmem>>, vector<1x1x4x128xf32>,
    %c14_i32 = arith.constant 14 : i32
    %342 = arith.addi %5, %c14_i32 : i32
    %343 = arith.index_cast %342 : i32 to index
    %c0_87 = arith.constant 0 : index
    %344 = memref.load %arg3[%343, %c0_87] : memref<32x3xf32, #tpu.memory_space<smem>>
    %345 = vector.broadcast %344 : f32 to vector<4x128xf32>
    %346 = arith.mulf %345, %2 : vector<4x128xf32>
    %347 = arith.index_cast %342 : i32 to index
    %c1_88 = arith.constant 1 : index
    %348 = memref.load %arg3[%347, %c1_88] : memref<32x3xf32, #tpu.memory_space<smem>>
    %349 = vector.broadcast %348 : f32 to vector<4x128xf32>
    %350 = arith.mulf %349, %3 : vector<4x128xf32>
    %351 = arith.addf %346, %350 : vector<4x128xf32>
    %352 = arith.index_cast %342 : i32 to index
    %c2_89 = arith.constant 2 : index
    %353 = memref.load %arg3[%352, %c2_89] : memref<32x3xf32, #tpu.memory_space<smem>>
    %354 = vector.broadcast %353 : f32 to vector<4x128xf32>
    %355 = arith.mulf %354, %4 : vector<4x128xf32>
    %356 = arith.addf %351, %355 : vector<4x128xf32>
    %357 = arith.index_cast %342 : i32 to index
    %358 = memref.load %arg4[%357] : memref<32xf32, #tpu.memory_space<smem>>
    %359 = vector.broadcast %358 : f32 to vector<4x128xf32>
    %360 = arith.cmpf ogt, %356, %359 : vector<4x128xf32>
    %361 = arith.extui %360 : vector<4x128xi1> to vector<4x128xi32>
    %362 = arith.sitofp %361 : vector<4x128xi32> to vector<4x128xf32>
    %c0_90 = arith.constant 0 : index
    %c14 = arith.constant 14 : index
    %c0_91 = arith.constant 0 : index
    %c0_92 = arith.constant 0 : index
    %363 = vector.load %arg5[%c0_90, %c14, %c0_91, %c0_92] : memref<1x32x4x128xf32, #tpu.memory_space<vmem>>, vector<1x1x4x128xf32>
    %364 = vector.shape_cast %363 : vector<1x1x4x128xf32> to vector<4x128xf32>
    %365 = vector.shape_cast %362 : vector<4x128xf32> to vector<1x1x4x128xf32>
    tpu.vector_store %arg5[%c0_90, %c14, %c0_91, %c0_92], %365 {strides = array<i32>} : memref<1x32x4x128xf32, #tpu.memory_space<vmem>>, vector<1x1x4x128xf32>,
    %c15_i32 = arith.constant 15 : i32
    %366 = arith.addi %5, %c15_i32 : i32
    %367 = arith.index_cast %366 : i32 to index
    %c0_93 = arith.constant 0 : index
    %368 = memref.load %arg3[%367, %c0_93] : memref<32x3xf32, #tpu.memory_space<smem>>
    %369 = vector.broadcast %368 : f32 to vector<4x128xf32>
    %370 = arith.mulf %369, %2 : vector<4x128xf32>
    %371 = arith.index_cast %366 : i32 to index
    %c1_94 = arith.constant 1 : index
    %372 = memref.load %arg3[%371, %c1_94] : memref<32x3xf32, #tpu.memory_space<smem>>
    %373 = vector.broadcast %372 : f32 to vector<4x128xf32>
    %374 = arith.mulf %373, %3 : vector<4x128xf32>
    %375 = arith.addf %370, %374 : vector<4x128xf32>
    %376 = arith.index_cast %366 : i32 to index
    %c2_95 = arith.constant 2 : index
    %377 = memref.load %arg3[%376, %c2_95] : memref<32x3xf32, #tpu.memory_space<smem>>
    %378 = vector.broadcast %377 : f32 to vector<4x128xf32>
    %379 = arith.mulf %378, %4 : vector<4x128xf32>
    %380 = arith.addf %375, %379 : vector<4x128xf32>
    %381 = arith.index_cast %366 : i32 to index
    %382 = memref.load %arg4[%381] : memref<32xf32, #tpu.memory_space<smem>>
    %383 = vector.broadcast %382 : f32 to vector<4x128xf32>
    %384 = arith.cmpf ogt, %380, %383 : vector<4x128xf32>
    %385 = arith.extui %384 : vector<4x128xi1> to vector<4x128xi32>
    %386 = arith.sitofp %385 : vector<4x128xi32> to vector<4x128xf32>
    %c0_96 = arith.constant 0 : index
    %c15 = arith.constant 15 : index
    %c0_97 = arith.constant 0 : index
    %c0_98 = arith.constant 0 : index
    %387 = vector.load %arg5[%c0_96, %c15, %c0_97, %c0_98] : memref<1x32x4x128xf32, #tpu.memory_space<vmem>>, vector<1x1x4x128xf32>
    %388 = vector.shape_cast %387 : vector<1x1x4x128xf32> to vector<4x128xf32>
    %389 = vector.shape_cast %386 : vector<4x128xf32> to vector<1x1x4x128xf32>
    tpu.vector_store %arg5[%c0_96, %c15, %c0_97, %c0_98], %389 {strides = array<i32>} : memref<1x32x4x128xf32, #tpu.memory_space<vmem>>, vector<1x1x4x128xf32>,
    %c16_i32 = arith.constant 16 : i32
    %390 = arith.addi %5, %c16_i32 : i32
    %391 = arith.index_cast %390 : i32 to index
    %c0_99 = arith.constant 0 : index
    %392 = memref.load %arg3[%391, %c0_99] : memref<32x3xf32, #tpu.memory_space<smem>>
    %393 = vector.broadcast %392 : f32 to vector<4x128xf32>
    %394 = arith.mulf %393, %2 : vector<4x128xf32>
    %395 = arith.index_cast %390 : i32 to index
    %c1_100 = arith.constant 1 : index
    %396 = memref.load %arg3[%395, %c1_100] : memref<32x3xf32, #tpu.memory_space<smem>>
    %397 = vector.broadcast %396 : f32 to vector<4x128xf32>
    %398 = arith.mulf %397, %3 : vector<4x128xf32>
    %399 = arith.addf %394, %398 : vector<4x128xf32>
    %400 = arith.index_cast %390 : i32 to index
    %c2_101 = arith.constant 2 : index
    %401 = memref.load %arg3[%400, %c2_101] : memref<32x3xf32, #tpu.memory_space<smem>>
    %402 = vector.broadcast %401 : f32 to vector<4x128xf32>
    %403 = arith.mulf %402, %4 : vector<4x128xf32>
    %404 = arith.addf %399, %403 : vector<4x128xf32>
    %405 = arith.index_cast %390 : i32 to index
    %406 = memref.load %arg4[%405] : memref<32xf32, #tpu.memory_space<smem>>
    %407 = vector.broadcast %406 : f32 to vector<4x128xf32>
    %408 = arith.cmpf ogt, %404, %407 : vector<4x128xf32>
    %409 = arith.extui %408 : vector<4x128xi1> to vector<4x128xi32>
    %410 = arith.sitofp %409 : vector<4x128xi32> to vector<4x128xf32>
    %c0_102 = arith.constant 0 : index
    %c16 = arith.constant 16 : index
    %c0_103 = arith.constant 0 : index
    %c0_104 = arith.constant 0 : index
    %411 = vector.load %arg5[%c0_102, %c16, %c0_103, %c0_104] : memref<1x32x4x128xf32, #tpu.memory_space<vmem>>, vector<1x1x4x128xf32>
    %412 = vector.shape_cast %411 : vector<1x1x4x128xf32> to vector<4x128xf32>
    %413 = vector.shape_cast %410 : vector<4x128xf32> to vector<1x1x4x128xf32>
    tpu.vector_store %arg5[%c0_102, %c16, %c0_103, %c0_104], %413 {strides = array<i32>} : memref<1x32x4x128xf32, #tpu.memory_space<vmem>>, vector<1x1x4x128xf32>,
    %c17_i32 = arith.constant 17 : i32
    %414 = arith.addi %5, %c17_i32 : i32
    %415 = arith.index_cast %414 : i32 to index
    %c0_105 = arith.constant 0 : index
    %416 = memref.load %arg3[%415, %c0_105] : memref<32x3xf32, #tpu.memory_space<smem>>
    %417 = vector.broadcast %416 : f32 to vector<4x128xf32>
    %418 = arith.mulf %417, %2 : vector<4x128xf32>
    %419 = arith.index_cast %414 : i32 to index
    %c1_106 = arith.constant 1 : index
    %420 = memref.load %arg3[%419, %c1_106] : memref<32x3xf32, #tpu.memory_space<smem>>
    %421 = vector.broadcast %420 : f32 to vector<4x128xf32>
    %422 = arith.mulf %421, %3 : vector<4x128xf32>
    %423 = arith.addf %418, %422 : vector<4x128xf32>
    %424 = arith.index_cast %414 : i32 to index
    %c2_107 = arith.constant 2 : index
    %425 = memref.load %arg3[%424, %c2_107] : memref<32x3xf32, #tpu.memory_space<smem>>
    %426 = vector.broadcast %425 : f32 to vector<4x128xf32>
    %427 = arith.mulf %426, %4 : vector<4x128xf32>
    %428 = arith.addf %423, %427 : vector<4x128xf32>
    %429 = arith.index_cast %414 : i32 to index
    %430 = memref.load %arg4[%429] : memref<32xf32, #tpu.memory_space<smem>>
    %431 = vector.broadcast %430 : f32 to vector<4x128xf32>
    %432 = arith.cmpf ogt, %428, %431 : vector<4x128xf32>
    %433 = arith.extui %432 : vector<4x128xi1> to vector<4x128xi32>
    %434 = arith.sitofp %433 : vector<4x128xi32> to vector<4x128xf32>
    %c0_108 = arith.constant 0 : index
    %c17 = arith.constant 17 : index
    %c0_109 = arith.constant 0 : index
    %c0_110 = arith.constant 0 : index
    %435 = vector.load %arg5[%c0_108, %c17, %c0_109, %c0_110] : memref<1x32x4x128xf32, #tpu.memory_space<vmem>>, vector<1x1x4x128xf32>
    %436 = vector.shape_cast %435 : vector<1x1x4x128xf32> to vector<4x128xf32>
    %437 = vector.shape_cast %434 : vector<4x128xf32> to vector<1x1x4x128xf32>
    tpu.vector_store %arg5[%c0_108, %c17, %c0_109, %c0_110], %437 {strides = array<i32>} : memref<1x32x4x128xf32, #tpu.memory_space<vmem>>, vector<1x1x4x128xf32>,
    %c18_i32 = arith.constant 18 : i32
    %438 = arith.addi %5, %c18_i32 : i32
    %439 = arith.index_cast %438 : i32 to index
    %c0_111 = arith.constant 0 : index
    %440 = memref.load %arg3[%439, %c0_111] : memref<32x3xf32, #tpu.memory_space<smem>>
    %441 = vector.broadcast %440 : f32 to vector<4x128xf32>
    %442 = arith.mulf %441, %2 : vector<4x128xf32>
    %443 = arith.index_cast %438 : i32 to index
    %c1_112 = arith.constant 1 : index
    %444 = memref.load %arg3[%443, %c1_112] : memref<32x3xf32, #tpu.memory_space<smem>>
    %445 = vector.broadcast %444 : f32 to vector<4x128xf32>
    %446 = arith.mulf %445, %3 : vector<4x128xf32>
    %447 = arith.addf %442, %446 : vector<4x128xf32>
    %448 = arith.index_cast %438 : i32 to index
    %c2_113 = arith.constant 2 : index
    %449 = memref.load %arg3[%448, %c2_113] : memref<32x3xf32, #tpu.memory_space<smem>>
    %450 = vector.broadcast %449 : f32 to vector<4x128xf32>
    %451 = arith.mulf %450, %4 : vector<4x128xf32>
    %452 = arith.addf %447, %451 : vector<4x128xf32>
    %453 = arith.index_cast %438 : i32 to index
    %454 = memref.load %arg4[%453] : memref<32xf32, #tpu.memory_space<smem>>
    %455 = vector.broadcast %454 : f32 to vector<4x128xf32>
    %456 = arith.cmpf ogt, %452, %455 : vector<4x128xf32>
    %457 = arith.extui %456 : vector<4x128xi1> to vector<4x128xi32>
    %458 = arith.sitofp %457 : vector<4x128xi32> to vector<4x128xf32>
    %c0_114 = arith.constant 0 : index
    %c18 = arith.constant 18 : index
    %c0_115 = arith.constant 0 : index
    %c0_116 = arith.constant 0 : index
    %459 = vector.load %arg5[%c0_114, %c18, %c0_115, %c0_116] : memref<1x32x4x128xf32, #tpu.memory_space<vmem>>, vector<1x1x4x128xf32>
    %460 = vector.shape_cast %459 : vector<1x1x4x128xf32> to vector<4x128xf32>
    %461 = vector.shape_cast %458 : vector<4x128xf32> to vector<1x1x4x128xf32>
    tpu.vector_store %arg5[%c0_114, %c18, %c0_115, %c0_116], %461 {strides = array<i32>} : memref<1x32x4x128xf32, #tpu.memory_space<vmem>>, vector<1x1x4x128xf32>,
    %c19_i32 = arith.constant 19 : i32
    %462 = arith.addi %5, %c19_i32 : i32
    %463 = arith.index_cast %462 : i32 to index
    %c0_117 = arith.constant 0 : index
    %464 = memref.load %arg3[%463, %c0_117] : memref<32x3xf32, #tpu.memory_space<smem>>
    %465 = vector.broadcast %464 : f32 to vector<4x128xf32>
    %466 = arith.mulf %465, %2 : vector<4x128xf32>
    %467 = arith.index_cast %462 : i32 to index
    %c1_118 = arith.constant 1 : index
    %468 = memref.load %arg3[%467, %c1_118] : memref<32x3xf32, #tpu.memory_space<smem>>
    %469 = vector.broadcast %468 : f32 to vector<4x128xf32>
    %470 = arith.mulf %469, %3 : vector<4x128xf32>
    %471 = arith.addf %466, %470 : vector<4x128xf32>
    %472 = arith.index_cast %462 : i32 to index
    %c2_119 = arith.constant 2 : index
    %473 = memref.load %arg3[%472, %c2_119] : memref<32x3xf32, #tpu.memory_space<smem>>
    %474 = vector.broadcast %473 : f32 to vector<4x128xf32>
    %475 = arith.mulf %474, %4 : vector<4x128xf32>
    %476 = arith.addf %471, %475 : vector<4x128xf32>
    %477 = arith.index_cast %462 : i32 to index
    %478 = memref.load %arg4[%477] : memref<32xf32, #tpu.memory_space<smem>>
    %479 = vector.broadcast %478 : f32 to vector<4x128xf32>
    %480 = arith.cmpf ogt, %476, %479 : vector<4x128xf32>
    %481 = arith.extui %480 : vector<4x128xi1> to vector<4x128xi32>
    %482 = arith.sitofp %481 : vector<4x128xi32> to vector<4x128xf32>
    %c0_120 = arith.constant 0 : index
    %c19 = arith.constant 19 : index
    %c0_121 = arith.constant 0 : index
    %c0_122 = arith.constant 0 : index
    %483 = vector.load %arg5[%c0_120, %c19, %c0_121, %c0_122] : memref<1x32x4x128xf32, #tpu.memory_space<vmem>>, vector<1x1x4x128xf32>
    %484 = vector.shape_cast %483 : vector<1x1x4x128xf32> to vector<4x128xf32>
    %485 = vector.shape_cast %482 : vector<4x128xf32> to vector<1x1x4x128xf32>
    tpu.vector_store %arg5[%c0_120, %c19, %c0_121, %c0_122], %485 {strides = array<i32>} : memref<1x32x4x128xf32, #tpu.memory_space<vmem>>, vector<1x1x4x128xf32>,
    %c20_i32 = arith.constant 20 : i32
    %486 = arith.addi %5, %c20_i32 : i32
    %487 = arith.index_cast %486 : i32 to index
    %c0_123 = arith.constant 0 : index
    %488 = memref.load %arg3[%487, %c0_123] : memref<32x3xf32, #tpu.memory_space<smem>>
    %489 = vector.broadcast %488 : f32 to vector<4x128xf32>
    %490 = arith.mulf %489, %2 : vector<4x128xf32>
    %491 = arith.index_cast %486 : i32 to index
    %c1_124 = arith.constant 1 : index
    %492 = memref.load %arg3[%491, %c1_124] : memref<32x3xf32, #tpu.memory_space<smem>>
    %493 = vector.broadcast %492 : f32 to vector<4x128xf32>
    %494 = arith.mulf %493, %3 : vector<4x128xf32>
    %495 = arith.addf %490, %494 : vector<4x128xf32>
    %496 = arith.index_cast %486 : i32 to index
    %c2_125 = arith.constant 2 : index
    %497 = memref.load %arg3[%496, %c2_125] : memref<32x3xf32, #tpu.memory_space<smem>>
    %498 = vector.broadcast %497 : f32 to vector<4x128xf32>
    %499 = arith.mulf %498, %4 : vector<4x128xf32>
    %500 = arith.addf %495, %499 : vector<4x128xf32>
    %501 = arith.index_cast %486 : i32 to index
    %502 = memref.load %arg4[%501] : memref<32xf32, #tpu.memory_space<smem>>
    %503 = vector.broadcast %502 : f32 to vector<4x128xf32>
    %504 = arith.cmpf ogt, %500, %503 : vector<4x128xf32>
    %505 = arith.extui %504 : vector<4x128xi1> to vector<4x128xi32>
    %506 = arith.sitofp %505 : vector<4x128xi32> to vector<4x128xf32>
    %c0_126 = arith.constant 0 : index
    %c20 = arith.constant 20 : index
    %c0_127 = arith.constant 0 : index
    %c0_128 = arith.constant 0 : index
    %507 = vector.load %arg5[%c0_126, %c20, %c0_127, %c0_128] : memref<1x32x4x128xf32, #tpu.memory_space<vmem>>, vector<1x1x4x128xf32>
    %508 = vector.shape_cast %507 : vector<1x1x4x128xf32> to vector<4x128xf32>
    %509 = vector.shape_cast %506 : vector<4x128xf32> to vector<1x1x4x128xf32>
    tpu.vector_store %arg5[%c0_126, %c20, %c0_127, %c0_128], %509 {strides = array<i32>} : memref<1x32x4x128xf32, #tpu.memory_space<vmem>>, vector<1x1x4x128xf32>,
    %c21_i32 = arith.constant 21 : i32
    %510 = arith.addi %5, %c21_i32 : i32
    %511 = arith.index_cast %510 : i32 to index
    %c0_129 = arith.constant 0 : index
    %512 = memref.load %arg3[%511, %c0_129] : memref<32x3xf32, #tpu.memory_space<smem>>
    %513 = vector.broadcast %512 : f32 to vector<4x128xf32>
    %514 = arith.mulf %513, %2 : vector<4x128xf32>
    %515 = arith.index_cast %510 : i32 to index
    %c1_130 = arith.constant 1 : index
    %516 = memref.load %arg3[%515, %c1_130] : memref<32x3xf32, #tpu.memory_space<smem>>
    %517 = vector.broadcast %516 : f32 to vector<4x128xf32>
    %518 = arith.mulf %517, %3 : vector<4x128xf32>
    %519 = arith.addf %514, %518 : vector<4x128xf32>
    %520 = arith.index_cast %510 : i32 to index
    %c2_131 = arith.constant 2 : index
    %521 = memref.load %arg3[%520, %c2_131] : memref<32x3xf32, #tpu.memory_space<smem>>
    %522 = vector.broadcast %521 : f32 to vector<4x128xf32>
    %523 = arith.mulf %522, %4 : vector<4x128xf32>
    %524 = arith.addf %519, %523 : vector<4x128xf32>
    %525 = arith.index_cast %510 : i32 to index
    %526 = memref.load %arg4[%525] : memref<32xf32, #tpu.memory_space<smem>>
    %527 = vector.broadcast %526 : f32 to vector<4x128xf32>
    %528 = arith.cmpf ogt, %524, %527 : vector<4x128xf32>
    %529 = arith.extui %528 : vector<4x128xi1> to vector<4x128xi32>
    %530 = arith.sitofp %529 : vector<4x128xi32> to vector<4x128xf32>
    %c0_132 = arith.constant 0 : index
    %c21 = arith.constant 21 : index
    %c0_133 = arith.constant 0 : index
    %c0_134 = arith.constant 0 : index
    %531 = vector.load %arg5[%c0_132, %c21, %c0_133, %c0_134] : memref<1x32x4x128xf32, #tpu.memory_space<vmem>>, vector<1x1x4x128xf32>
    %532 = vector.shape_cast %531 : vector<1x1x4x128xf32> to vector<4x128xf32>
    %533 = vector.shape_cast %530 : vector<4x128xf32> to vector<1x1x4x128xf32>
    tpu.vector_store %arg5[%c0_132, %c21, %c0_133, %c0_134], %533 {strides = array<i32>} : memref<1x32x4x128xf32, #tpu.memory_space<vmem>>, vector<1x1x4x128xf32>,
    %c22_i32 = arith.constant 22 : i32
    %534 = arith.addi %5, %c22_i32 : i32
    %535 = arith.index_cast %534 : i32 to index
    %c0_135 = arith.constant 0 : index
    %536 = memref.load %arg3[%535, %c0_135] : memref<32x3xf32, #tpu.memory_space<smem>>
    %537 = vector.broadcast %536 : f32 to vector<4x128xf32>
    %538 = arith.mulf %537, %2 : vector<4x128xf32>
    %539 = arith.index_cast %534 : i32 to index
    %c1_136 = arith.constant 1 : index
    %540 = memref.load %arg3[%539, %c1_136] : memref<32x3xf32, #tpu.memory_space<smem>>
    %541 = vector.broadcast %540 : f32 to vector<4x128xf32>
    %542 = arith.mulf %541, %3 : vector<4x128xf32>
    %543 = arith.addf %538, %542 : vector<4x128xf32>
    %544 = arith.index_cast %534 : i32 to index
    %c2_137 = arith.constant 2 : index
    %545 = memref.load %arg3[%544, %c2_137] : memref<32x3xf32, #tpu.memory_space<smem>>
    %546 = vector.broadcast %545 : f32 to vector<4x128xf32>
    %547 = arith.mulf %546, %4 : vector<4x128xf32>
    %548 = arith.addf %543, %547 : vector<4x128xf32>
    %549 = arith.index_cast %534 : i32 to index
    %550 = memref.load %arg4[%549] : memref<32xf32, #tpu.memory_space<smem>>
    %551 = vector.broadcast %550 : f32 to vector<4x128xf32>
    %552 = arith.cmpf ogt, %548, %551 : vector<4x128xf32>
    %553 = arith.extui %552 : vector<4x128xi1> to vector<4x128xi32>
    %554 = arith.sitofp %553 : vector<4x128xi32> to vector<4x128xf32>
    %c0_138 = arith.constant 0 : index
    %c22 = arith.constant 22 : index
    %c0_139 = arith.constant 0 : index
    %c0_140 = arith.constant 0 : index
    %555 = vector.load %arg5[%c0_138, %c22, %c0_139, %c0_140] : memref<1x32x4x128xf32, #tpu.memory_space<vmem>>, vector<1x1x4x128xf32>
    %556 = vector.shape_cast %555 : vector<1x1x4x128xf32> to vector<4x128xf32>
    %557 = vector.shape_cast %554 : vector<4x128xf32> to vector<1x1x4x128xf32>
    tpu.vector_store %arg5[%c0_138, %c22, %c0_139, %c0_140], %557 {strides = array<i32>} : memref<1x32x4x128xf32, #tpu.memory_space<vmem>>, vector<1x1x4x128xf32>,
    %c23_i32 = arith.constant 23 : i32
    %558 = arith.addi %5, %c23_i32 : i32
    %559 = arith.index_cast %558 : i32 to index
    %c0_141 = arith.constant 0 : index
    %560 = memref.load %arg3[%559, %c0_141] : memref<32x3xf32, #tpu.memory_space<smem>>
    %561 = vector.broadcast %560 : f32 to vector<4x128xf32>
    %562 = arith.mulf %561, %2 : vector<4x128xf32>
    %563 = arith.index_cast %558 : i32 to index
    %c1_142 = arith.constant 1 : index
    %564 = memref.load %arg3[%563, %c1_142] : memref<32x3xf32, #tpu.memory_space<smem>>
    %565 = vector.broadcast %564 : f32 to vector<4x128xf32>
    %566 = arith.mulf %565, %3 : vector<4x128xf32>
    %567 = arith.addf %562, %566 : vector<4x128xf32>
    %568 = arith.index_cast %558 : i32 to index
    %c2_143 = arith.constant 2 : index
    %569 = memref.load %arg3[%568, %c2_143] : memref<32x3xf32, #tpu.memory_space<smem>>
    %570 = vector.broadcast %569 : f32 to vector<4x128xf32>
    %571 = arith.mulf %570, %4 : vector<4x128xf32>
    %572 = arith.addf %567, %571 : vector<4x128xf32>
    %573 = arith.index_cast %558 : i32 to index
    %574 = memref.load %arg4[%573] : memref<32xf32, #tpu.memory_space<smem>>
    %575 = vector.broadcast %574 : f32 to vector<4x128xf32>
    %576 = arith.cmpf ogt, %572, %575 : vector<4x128xf32>
    %577 = arith.extui %576 : vector<4x128xi1> to vector<4x128xi32>
    %578 = arith.sitofp %577 : vector<4x128xi32> to vector<4x128xf32>
    %c0_144 = arith.constant 0 : index
    %c23 = arith.constant 23 : index
    %c0_145 = arith.constant 0 : index
    %c0_146 = arith.constant 0 : index
    %579 = vector.load %arg5[%c0_144, %c23, %c0_145, %c0_146] : memref<1x32x4x128xf32, #tpu.memory_space<vmem>>, vector<1x1x4x128xf32>
    %580 = vector.shape_cast %579 : vector<1x1x4x128xf32> to vector<4x128xf32>
    %581 = vector.shape_cast %578 : vector<4x128xf32> to vector<1x1x4x128xf32>
    tpu.vector_store %arg5[%c0_144, %c23, %c0_145, %c0_146], %581 {strides = array<i32>} : memref<1x32x4x128xf32, #tpu.memory_space<vmem>>, vector<1x1x4x128xf32>,
    %c24_i32 = arith.constant 24 : i32
    %582 = arith.addi %5, %c24_i32 : i32
    %583 = arith.index_cast %582 : i32 to index
    %c0_147 = arith.constant 0 : index
    %584 = memref.load %arg3[%583, %c0_147] : memref<32x3xf32, #tpu.memory_space<smem>>
    %585 = vector.broadcast %584 : f32 to vector<4x128xf32>
    %586 = arith.mulf %585, %2 : vector<4x128xf32>
    %587 = arith.index_cast %582 : i32 to index
    %c1_148 = arith.constant 1 : index
    %588 = memref.load %arg3[%587, %c1_148] : memref<32x3xf32, #tpu.memory_space<smem>>
    %589 = vector.broadcast %588 : f32 to vector<4x128xf32>
    %590 = arith.mulf %589, %3 : vector<4x128xf32>
    %591 = arith.addf %586, %590 : vector<4x128xf32>
    %592 = arith.index_cast %582 : i32 to index
    %c2_149 = arith.constant 2 : index
    %593 = memref.load %arg3[%592, %c2_149] : memref<32x3xf32, #tpu.memory_space<smem>>
    %594 = vector.broadcast %593 : f32 to vector<4x128xf32>
    %595 = arith.mulf %594, %4 : vector<4x128xf32>
    %596 = arith.addf %591, %595 : vector<4x128xf32>
    %597 = arith.index_cast %582 : i32 to index
    %598 = memref.load %arg4[%597] : memref<32xf32, #tpu.memory_space<smem>>
    %599 = vector.broadcast %598 : f32 to vector<4x128xf32>
    %600 = arith.cmpf ogt, %596, %599 : vector<4x128xf32>
    %601 = arith.extui %600 : vector<4x128xi1> to vector<4x128xi32>
    %602 = arith.sitofp %601 : vector<4x128xi32> to vector<4x128xf32>
    %c0_150 = arith.constant 0 : index
    %c24 = arith.constant 24 : index
    %c0_151 = arith.constant 0 : index
    %c0_152 = arith.constant 0 : index
    %603 = vector.load %arg5[%c0_150, %c24, %c0_151, %c0_152] : memref<1x32x4x128xf32, #tpu.memory_space<vmem>>, vector<1x1x4x128xf32>
    %604 = vector.shape_cast %603 : vector<1x1x4x128xf32> to vector<4x128xf32>
    %605 = vector.shape_cast %602 : vector<4x128xf32> to vector<1x1x4x128xf32>
    tpu.vector_store %arg5[%c0_150, %c24, %c0_151, %c0_152], %605 {strides = array<i32>} : memref<1x32x4x128xf32, #tpu.memory_space<vmem>>, vector<1x1x4x128xf32>,
    %c25_i32 = arith.constant 25 : i32
    %606 = arith.addi %5, %c25_i32 : i32
    %607 = arith.index_cast %606 : i32 to index
    %c0_153 = arith.constant 0 : index
    %608 = memref.load %arg3[%607, %c0_153] : memref<32x3xf32, #tpu.memory_space<smem>>
    %609 = vector.broadcast %608 : f32 to vector<4x128xf32>
    %610 = arith.mulf %609, %2 : vector<4x128xf32>
    %611 = arith.index_cast %606 : i32 to index
    %c1_154 = arith.constant 1 : index
    %612 = memref.load %arg3[%611, %c1_154] : memref<32x3xf32, #tpu.memory_space<smem>>
    %613 = vector.broadcast %612 : f32 to vector<4x128xf32>
    %614 = arith.mulf %613, %3 : vector<4x128xf32>
    %615 = arith.addf %610, %614 : vector<4x128xf32>
    %616 = arith.index_cast %606 : i32 to index
    %c2_155 = arith.constant 2 : index
    %617 = memref.load %arg3[%616, %c2_155] : memref<32x3xf32, #tpu.memory_space<smem>>
    %618 = vector.broadcast %617 : f32 to vector<4x128xf32>
    %619 = arith.mulf %618, %4 : vector<4x128xf32>
    %620 = arith.addf %615, %619 : vector<4x128xf32>
    %621 = arith.index_cast %606 : i32 to index
    %622 = memref.load %arg4[%621] : memref<32xf32, #tpu.memory_space<smem>>
    %623 = vector.broadcast %622 : f32 to vector<4x128xf32>
    %624 = arith.cmpf ogt, %620, %623 : vector<4x128xf32>
    %625 = arith.extui %624 : vector<4x128xi1> to vector<4x128xi32>
    %626 = arith.sitofp %625 : vector<4x128xi32> to vector<4x128xf32>
    %c0_156 = arith.constant 0 : index
    %c25 = arith.constant 25 : index
    %c0_157 = arith.constant 0 : index
    %c0_158 = arith.constant 0 : index
    %627 = vector.load %arg5[%c0_156, %c25, %c0_157, %c0_158] : memref<1x32x4x128xf32, #tpu.memory_space<vmem>>, vector<1x1x4x128xf32>
    %628 = vector.shape_cast %627 : vector<1x1x4x128xf32> to vector<4x128xf32>
    %629 = vector.shape_cast %626 : vector<4x128xf32> to vector<1x1x4x128xf32>
    tpu.vector_store %arg5[%c0_156, %c25, %c0_157, %c0_158], %629 {strides = array<i32>} : memref<1x32x4x128xf32, #tpu.memory_space<vmem>>, vector<1x1x4x128xf32>,
    %c26_i32 = arith.constant 26 : i32
    %630 = arith.addi %5, %c26_i32 : i32
    %631 = arith.index_cast %630 : i32 to index
    %c0_159 = arith.constant 0 : index
    %632 = memref.load %arg3[%631, %c0_159] : memref<32x3xf32, #tpu.memory_space<smem>>
    %633 = vector.broadcast %632 : f32 to vector<4x128xf32>
    %634 = arith.mulf %633, %2 : vector<4x128xf32>
    %635 = arith.index_cast %630 : i32 to index
    %c1_160 = arith.constant 1 : index
    %636 = memref.load %arg3[%635, %c1_160] : memref<32x3xf32, #tpu.memory_space<smem>>
    %637 = vector.broadcast %636 : f32 to vector<4x128xf32>
    %638 = arith.mulf %637, %3 : vector<4x128xf32>
    %639 = arith.addf %634, %638 : vector<4x128xf32>
    %640 = arith.index_cast %630 : i32 to index
    %c2_161 = arith.constant 2 : index
    %641 = memref.load %arg3[%640, %c2_161] : memref<32x3xf32, #tpu.memory_space<smem>>
    %642 = vector.broadcast %641 : f32 to vector<4x128xf32>
    %643 = arith.mulf %642, %4 : vector<4x128xf32>
    %644 = arith.addf %639, %643 : vector<4x128xf32>
    %645 = arith.index_cast %630 : i32 to index
    %646 = memref.load %arg4[%645] : memref<32xf32, #tpu.memory_space<smem>>
    %647 = vector.broadcast %646 : f32 to vector<4x128xf32>
    %648 = arith.cmpf ogt, %644, %647 : vector<4x128xf32>
    %649 = arith.extui %648 : vector<4x128xi1> to vector<4x128xi32>
    %650 = arith.sitofp %649 : vector<4x128xi32> to vector<4x128xf32>
    %c0_162 = arith.constant 0 : index
    %c26 = arith.constant 26 : index
    %c0_163 = arith.constant 0 : index
    %c0_164 = arith.constant 0 : index
    %651 = vector.load %arg5[%c0_162, %c26, %c0_163, %c0_164] : memref<1x32x4x128xf32, #tpu.memory_space<vmem>>, vector<1x1x4x128xf32>
    %652 = vector.shape_cast %651 : vector<1x1x4x128xf32> to vector<4x128xf32>
    %653 = vector.shape_cast %650 : vector<4x128xf32> to vector<1x1x4x128xf32>
    tpu.vector_store %arg5[%c0_162, %c26, %c0_163, %c0_164], %653 {strides = array<i32>} : memref<1x32x4x128xf32, #tpu.memory_space<vmem>>, vector<1x1x4x128xf32>,
    %c27_i32 = arith.constant 27 : i32
    %654 = arith.addi %5, %c27_i32 : i32
    %655 = arith.index_cast %654 : i32 to index
    %c0_165 = arith.constant 0 : index
    %656 = memref.load %arg3[%655, %c0_165] : memref<32x3xf32, #tpu.memory_space<smem>>
    %657 = vector.broadcast %656 : f32 to vector<4x128xf32>
    %658 = arith.mulf %657, %2 : vector<4x128xf32>
    %659 = arith.index_cast %654 : i32 to index
    %c1_166 = arith.constant 1 : index
    %660 = memref.load %arg3[%659, %c1_166] : memref<32x3xf32, #tpu.memory_space<smem>>
    %661 = vector.broadcast %660 : f32 to vector<4x128xf32>
    %662 = arith.mulf %661, %3 : vector<4x128xf32>
    %663 = arith.addf %658, %662 : vector<4x128xf32>
    %664 = arith.index_cast %654 : i32 to index
    %c2_167 = arith.constant 2 : index
    %665 = memref.load %arg3[%664, %c2_167] : memref<32x3xf32, #tpu.memory_space<smem>>
    %666 = vector.broadcast %665 : f32 to vector<4x128xf32>
    %667 = arith.mulf %666, %4 : vector<4x128xf32>
    %668 = arith.addf %663, %667 : vector<4x128xf32>
    %669 = arith.index_cast %654 : i32 to index
    %670 = memref.load %arg4[%669] : memref<32xf32, #tpu.memory_space<smem>>
    %671 = vector.broadcast %670 : f32 to vector<4x128xf32>
    %672 = arith.cmpf ogt, %668, %671 : vector<4x128xf32>
    %673 = arith.extui %672 : vector<4x128xi1> to vector<4x128xi32>
    %674 = arith.sitofp %673 : vector<4x128xi32> to vector<4x128xf32>
    %c0_168 = arith.constant 0 : index
    %c27 = arith.constant 27 : index
    %c0_169 = arith.constant 0 : index
    %c0_170 = arith.constant 0 : index
    %675 = vector.load %arg5[%c0_168, %c27, %c0_169, %c0_170] : memref<1x32x4x128xf32, #tpu.memory_space<vmem>>, vector<1x1x4x128xf32>
    %676 = vector.shape_cast %675 : vector<1x1x4x128xf32> to vector<4x128xf32>
    %677 = vector.shape_cast %674 : vector<4x128xf32> to vector<1x1x4x128xf32>
    tpu.vector_store %arg5[%c0_168, %c27, %c0_169, %c0_170], %677 {strides = array<i32>} : memref<1x32x4x128xf32, #tpu.memory_space<vmem>>, vector<1x1x4x128xf32>,
    %c28_i32 = arith.constant 28 : i32
    %678 = arith.addi %5, %c28_i32 : i32
    %679 = arith.index_cast %678 : i32 to index
    %c0_171 = arith.constant 0 : index
    %680 = memref.load %arg3[%679, %c0_171] : memref<32x3xf32, #tpu.memory_space<smem>>
    %681 = vector.broadcast %680 : f32 to vector<4x128xf32>
    %682 = arith.mulf %681, %2 : vector<4x128xf32>
    %683 = arith.index_cast %678 : i32 to index
    %c1_172 = arith.constant 1 : index
    %684 = memref.load %arg3[%683, %c1_172] : memref<32x3xf32, #tpu.memory_space<smem>>
    %685 = vector.broadcast %684 : f32 to vector<4x128xf32>
    %686 = arith.mulf %685, %3 : vector<4x128xf32>
    %687 = arith.addf %682, %686 : vector<4x128xf32>
    %688 = arith.index_cast %678 : i32 to index
    %c2_173 = arith.constant 2 : index
    %689 = memref.load %arg3[%688, %c2_173] : memref<32x3xf32, #tpu.memory_space<smem>>
    %690 = vector.broadcast %689 : f32 to vector<4x128xf32>
    %691 = arith.mulf %690, %4 : vector<4x128xf32>
    %692 = arith.addf %687, %691 : vector<4x128xf32>
    %693 = arith.index_cast %678 : i32 to index
    %694 = memref.load %arg4[%693] : memref<32xf32, #tpu.memory_space<smem>>
    %695 = vector.broadcast %694 : f32 to vector<4x128xf32>
    %696 = arith.cmpf ogt, %692, %695 : vector<4x128xf32>
    %697 = arith.extui %696 : vector<4x128xi1> to vector<4x128xi32>
    %698 = arith.sitofp %697 : vector<4x128xi32> to vector<4x128xf32>
    %c0_174 = arith.constant 0 : index
    %c28 = arith.constant 28 : index
    %c0_175 = arith.constant 0 : index
    %c0_176 = arith.constant 0 : index
    %699 = vector.load %arg5[%c0_174, %c28, %c0_175, %c0_176] : memref<1x32x4x128xf32, #tpu.memory_space<vmem>>, vector<1x1x4x128xf32>
    %700 = vector.shape_cast %699 : vector<1x1x4x128xf32> to vector<4x128xf32>
    %701 = vector.shape_cast %698 : vector<4x128xf32> to vector<1x1x4x128xf32>
    tpu.vector_store %arg5[%c0_174, %c28, %c0_175, %c0_176], %701 {strides = array<i32>} : memref<1x32x4x128xf32, #tpu.memory_space<vmem>>, vector<1x1x4x128xf32>,
    %c29_i32 = arith.constant 29 : i32
    %702 = arith.addi %5, %c29_i32 : i32
    %703 = arith.index_cast %702 : i32 to index
    %c0_177 = arith.constant 0 : index
    %704 = memref.load %arg3[%703, %c0_177] : memref<32x3xf32, #tpu.memory_space<smem>>
    %705 = vector.broadcast %704 : f32 to vector<4x128xf32>
    %706 = arith.mulf %705, %2 : vector<4x128xf32>
    %707 = arith.index_cast %702 : i32 to index
    %c1_178 = arith.constant 1 : index
    %708 = memref.load %arg3[%707, %c1_178] : memref<32x3xf32, #tpu.memory_space<smem>>
    %709 = vector.broadcast %708 : f32 to vector<4x128xf32>
    %710 = arith.mulf %709, %3 : vector<4x128xf32>
    %711 = arith.addf %706, %710 : vector<4x128xf32>
    %712 = arith.index_cast %702 : i32 to index
    %c2_179 = arith.constant 2 : index
    %713 = memref.load %arg3[%712, %c2_179] : memref<32x3xf32, #tpu.memory_space<smem>>
    %714 = vector.broadcast %713 : f32 to vector<4x128xf32>
    %715 = arith.mulf %714, %4 : vector<4x128xf32>
    %716 = arith.addf %711, %715 : vector<4x128xf32>
    %717 = arith.index_cast %702 : i32 to index
    %718 = memref.load %arg4[%717] : memref<32xf32, #tpu.memory_space<smem>>
    %719 = vector.broadcast %718 : f32 to vector<4x128xf32>
    %720 = arith.cmpf ogt, %716, %719 : vector<4x128xf32>
    %721 = arith.extui %720 : vector<4x128xi1> to vector<4x128xi32>
    %722 = arith.sitofp %721 : vector<4x128xi32> to vector<4x128xf32>
    %c0_180 = arith.constant 0 : index
    %c29 = arith.constant 29 : index
    %c0_181 = arith.constant 0 : index
    %c0_182 = arith.constant 0 : index
    %723 = vector.load %arg5[%c0_180, %c29, %c0_181, %c0_182] : memref<1x32x4x128xf32, #tpu.memory_space<vmem>>, vector<1x1x4x128xf32>
    %724 = vector.shape_cast %723 : vector<1x1x4x128xf32> to vector<4x128xf32>
    %725 = vector.shape_cast %722 : vector<4x128xf32> to vector<1x1x4x128xf32>
    tpu.vector_store %arg5[%c0_180, %c29, %c0_181, %c0_182], %725 {strides = array<i32>} : memref<1x32x4x128xf32, #tpu.memory_space<vmem>>, vector<1x1x4x128xf32>,
    %c30_i32 = arith.constant 30 : i32
    %726 = arith.addi %5, %c30_i32 : i32
    %727 = arith.index_cast %726 : i32 to index
    %c0_183 = arith.constant 0 : index
    %728 = memref.load %arg3[%727, %c0_183] : memref<32x3xf32, #tpu.memory_space<smem>>
    %729 = vector.broadcast %728 : f32 to vector<4x128xf32>
    %730 = arith.mulf %729, %2 : vector<4x128xf32>
    %731 = arith.index_cast %726 : i32 to index
    %c1_184 = arith.constant 1 : index
    %732 = memref.load %arg3[%731, %c1_184] : memref<32x3xf32, #tpu.memory_space<smem>>
    %733 = vector.broadcast %732 : f32 to vector<4x128xf32>
    %734 = arith.mulf %733, %3 : vector<4x128xf32>
    %735 = arith.addf %730, %734 : vector<4x128xf32>
    %736 = arith.index_cast %726 : i32 to index
    %c2_185 = arith.constant 2 : index
    %737 = memref.load %arg3[%736, %c2_185] : memref<32x3xf32, #tpu.memory_space<smem>>
    %738 = vector.broadcast %737 : f32 to vector<4x128xf32>
    %739 = arith.mulf %738, %4 : vector<4x128xf32>
    %740 = arith.addf %735, %739 : vector<4x128xf32>
    %741 = arith.index_cast %726 : i32 to index
    %742 = memref.load %arg4[%741] : memref<32xf32, #tpu.memory_space<smem>>
    %743 = vector.broadcast %742 : f32 to vector<4x128xf32>
    %744 = arith.cmpf ogt, %740, %743 : vector<4x128xf32>
    %745 = arith.extui %744 : vector<4x128xi1> to vector<4x128xi32>
    %746 = arith.sitofp %745 : vector<4x128xi32> to vector<4x128xf32>
    %c0_186 = arith.constant 0 : index
    %c30 = arith.constant 30 : index
    %c0_187 = arith.constant 0 : index
    %c0_188 = arith.constant 0 : index
    %747 = vector.load %arg5[%c0_186, %c30, %c0_187, %c0_188] : memref<1x32x4x128xf32, #tpu.memory_space<vmem>>, vector<1x1x4x128xf32>
    %748 = vector.shape_cast %747 : vector<1x1x4x128xf32> to vector<4x128xf32>
    %749 = vector.shape_cast %746 : vector<4x128xf32> to vector<1x1x4x128xf32>
    tpu.vector_store %arg5[%c0_186, %c30, %c0_187, %c0_188], %749 {strides = array<i32>} : memref<1x32x4x128xf32, #tpu.memory_space<vmem>>, vector<1x1x4x128xf32>,
    %c31_i32 = arith.constant 31 : i32
    %750 = arith.addi %5, %c31_i32 : i32
    %751 = arith.index_cast %750 : i32 to index
    %c0_189 = arith.constant 0 : index
    %752 = memref.load %arg3[%751, %c0_189] : memref<32x3xf32, #tpu.memory_space<smem>>
    %753 = vector.broadcast %752 : f32 to vector<4x128xf32>
    %754 = arith.mulf %753, %2 : vector<4x128xf32>
    %755 = arith.index_cast %750 : i32 to index
    %c1_190 = arith.constant 1 : index
    %756 = memref.load %arg3[%755, %c1_190] : memref<32x3xf32, #tpu.memory_space<smem>>
    %757 = vector.broadcast %756 : f32 to vector<4x128xf32>
    %758 = arith.mulf %757, %3 : vector<4x128xf32>
    %759 = arith.addf %754, %758 : vector<4x128xf32>
    %760 = arith.index_cast %750 : i32 to index
    %c2_191 = arith.constant 2 : index
    %761 = memref.load %arg3[%760, %c2_191] : memref<32x3xf32, #tpu.memory_space<smem>>
    %762 = vector.broadcast %761 : f32 to vector<4x128xf32>
    %763 = arith.mulf %762, %4 : vector<4x128xf32>
    %764 = arith.addf %759, %763 : vector<4x128xf32>
    %765 = arith.index_cast %750 : i32 to index
    %766 = memref.load %arg4[%765] : memref<32xf32, #tpu.memory_space<smem>>
    %767 = vector.broadcast %766 : f32 to vector<4x128xf32>
    %768 = arith.cmpf ogt, %764, %767 : vector<4x128xf32>
    %769 = arith.extui %768 : vector<4x128xi1> to vector<4x128xi32>
    %770 = arith.sitofp %769 : vector<4x128xi32> to vector<4x128xf32>
    %c0_192 = arith.constant 0 : index
    %c31 = arith.constant 31 : index
    %c0_193 = arith.constant 0 : index
    %c0_194 = arith.constant 0 : index
    %771 = vector.load %arg5[%c0_192, %c31, %c0_193, %c0_194] : memref<1x32x4x128xf32, #tpu.memory_space<vmem>>, vector<1x1x4x128xf32>
    %772 = vector.shape_cast %771 : vector<1x1x4x128xf32> to vector<4x128xf32>
    %773 = vector.shape_cast %770 : vector<4x128xf32> to vector<1x1x4x128xf32>
    tpu.vector_store %arg5[%c0_192, %c31, %c0_193, %c0_194], %773 {strides = array<i32>} : memref<1x32x4x128xf32, #tpu.memory_space<vmem>>, vector<1x1x4x128xf32>,
    return
  }
  func.func @transform_0(%arg0: i32, %arg1: i32) -> (i32, i32, i32) {
    %c0_i32 = arith.constant 0 : i32
    %c0_i32_0 = arith.constant 0 : i32
    %c0_i32_1 = arith.constant 0 : i32
    return %arg0, %c0_i32, %c0_i32_0 : i32, i32, i32
  }
  func.func @transform_1(%arg0: i32, %arg1: i32) -> (i32, i32) {
    %c0_i32 = arith.constant 0 : i32
    %c0_i32_0 = arith.constant 0 : i32
    %c0_i32_1 = arith.constant 0 : i32
    return %c0_i32, %c0_i32_0 : i32, i32
  }
  func.func @transform_2(%arg0: i32, %arg1: i32) -> i32 {
    %c0_i32 = arith.constant 0 : i32
    %c0_i32_0 = arith.constant 0 : i32
    return %c0_i32 : i32
  }
  func.func @transform_3(%arg0: i32, %arg1: i32) -> (i32, i32, i32, i32) {
    %c0_i32 = arith.constant 0 : i32
    %c0_i32_0 = arith.constant 0 : i32
    %c0_i32_1 = arith.constant 0 : i32
    return %arg0, %arg1, %c0_i32, %c0_i32_0 : i32, i32, i32, i32
  }
}

</mosaic_0001>

<llo_original>
// kernel: tpu_custom_call.1
$region0: #{tpu_custom_call.1}
  #allocation0 [shape = 'u32[]', space=smem, size = 0x4, offset = 0x4, fixed_abs, tag = 'smem constant byte address 0x4 - core index']
  #allocation1 [shape = 'u32[72,128]{1,0:T(1,128)}', space=vmem, size = 0x9000, scoped, tag = 'internal scratch']
  %s0 = inlined_call_operand.vmem [shape: f32[2,4,130], index: 0, kind: input, shape index: {}]
  %s1 = inlined_call_operand.vmem [shape: f32[32,3], index: 1, kind: input, shape index: {}]
  %s2 = inlined_call_operand.vmem [shape: f32[32], index: 2, kind: input, shape index: {}]
  %s3 = inlined_call_operand.hbm [shape: f32[2,32,4,128], index: 3, kind: output, shape index: {}]
  %s4 = sld [smem:[#allocation0]]
  $region53: #{tpu_custom_call.1} parent=0
    _
  %s6 = ssub.s32 1, %s4
  %s7 = scalar_select 0, %s6, %s4
  $region1: #{tpu_custom_call.1} parent=0
    #allocation2 [shape = 'u8[16384]{0}', space=smem, size = 0x4000, scoped, tag = 'input window, operand 1, single buffered']
    #allocation3 [shape = 's32[2]{0}', space=sflag, size = 0x8, scoped, tag = 'scoped memory for tpu_custom_call.1']
    #allocation4 [shape = 's32[2]{0}', space=sflag, size = 0x8, scoped, tag = 'scoped memory for tpu_custom_call.1']
    #allocation5 [shape = 'u8[512]{0}', space=smem, size = 0x200, scoped, tag = 'input window, operand 2, single buffered']
    #allocation6 [shape = 's32[1]{0}', space=sflag, size = 0x4, scoped, tag = 'scoped memory for tpu_custom_call.1']
    #allocation7 [shape = 'u8[131072]{0}', space=vmem, size = 0x20000, scoped, tag = 'output window, operand 0']
    %8 = vsyncpa [#allocation4], 0
    %9 = vsyncpa [#allocation6], 0
    %10 = vsyncpa [#allocation3], 0
    %s11 = scalar_lea.sflag [#allocation3], 1
    %12 = vsyncpa %s11, 0
    loop: start=0, step=1, limit=4
    $region2: #{tpu_custom_call.1} parent=1 // loop_pre_header
      _
    $region3: #{tpu_custom_call.1} parent=1 // loop_header
      %s14 = sphi 0, %s18
      %p15 = scmp.ge.s32.totalorder %s14, 4
      %s21 = sphi 0, %s33
      %s22 = sphi 0, %s29
      %s23 = sphi 0, %s21
      %s24 = sphi 0, %s22
      %s25 = sphi 0, %s23
      %s26 = sphi 0, %s24
      %s36 = sphi 0, %s38
      %s39 = sphi 0, %s36
      %s40 = sphi 0, %s39
      %s56 = sphi 0, %s40
      %s60 = sphi 0, %s60
      %s62 = sphi 0, %s60
      %s63 = sphi 0, %s62
      %s77 = sphi 0, %s63
      %s81 = sphi 0, %s81
      %s83 = sphi 0, %s81
      %s84 = sphi 0, %s83
      %s98 = sphi 0, %s84
      %s106 = sphi 0, %s108
      %s109 = sphi 0, %s106
      %s110 = sphi 0, %s109
      %s126 = sphi 0, %s110
    $region4: #{tpu_custom_call.1} parent=1 // loop_header_branch
      %17 = sbr.rel (%p15) target = $region8
    $region5: #{tpu_custom_call.1} parent=1 // loop_body
      %s19 = ssub.s32 %s14, 1
      %s20 = ssub.s32 %s14, 2
      %s27 = sadd.s32 1, %s22
      %p28 = scmp.ge.s32.totalorder %s27, 1
      %s29 = scalar_select %p28, 0, %s27
      %s30 = sadd.s32 1, %s21
      %s31 = scalar_select %p28, %s30, %s21
      %p32 = scmp.ge.s32.totalorder %s31, 2
      %s33 = scalar_select %p32, 0, %s31
      %s34 = ssub.s32 %s21, %s33
      %p35 = scmp.eq.s32.totalorder %s34, 0
      %s37 = sadd.s32 %s36, 1
      %s38 = scalar_select %p35, %s36, %s37
      %p41 = pneg %p35
      %p42 = scmp.eq.s32.totalorder %s14, 1
      %p43 = por %p41, %p42
      %p44 = scmp.ne.s32.totalorder %s36, %s39
      %p45 = scmp.eq.s32.totalorder %s14, 0
      %p46 = por %p44, %p45
      %p47 = scmp.ne.s32.totalorder %s36, %s39
      %p48 = scmp.eq.s32.totalorder %s19, 1
      %p49 = por %p47, %p48
      %p50 = scmp.ne.s32.totalorder %s39, %s40
      %p51 = scmp.eq.s32.totalorder %s19, 0
      %p52 = por %p50, %p51
      %p53 = scmp.ne.s32.totalorder %s39, %s40
      %p54 = scmp.eq.s32.totalorder %s20, 1
      %p55 = por %p53, %p54
      %p57 = scmp.ne.s32.totalorder %s40, %s56
      %p58 = scmp.eq.s32.totalorder %s20, 0
      %p59 = por %p57, %p58
      %s61 = sadd.s32 %s60, 1
      %p64 = scmp.eq.s32.totalorder %s14, 1
      %p65 = scmp.ne.s32.totalorder %s60, %s62
      %p66 = scmp.eq.s32.totalorder %s14, 0
      %p67 = por %p65, %p66
      %p68 = scmp.ne.s32.totalorder %s60, %s62
      %p69 = scmp.eq.s32.totalorder %s19, 1
      %p70 = por %p68, %p69
      %p71 = scmp.ne.s32.totalorder %s62, %s63
      %p72 = scmp.eq.s32.totalorder %s19, 0
      %p73 = por %p71, %p72
      %p74 = scmp.ne.s32.totalorder %s62, %s63
      %p75 = scmp.eq.s32.totalorder %s20, 1
      %p76 = por %p74, %p75
      %p78 = scmp.ne.s32.totalorder %s63, %s77
      %p79 = scmp.eq.s32.totalorder %s20, 0
      %p80 = por %p78, %p79
      %s82 = sadd.s32 %s81, 1
      %p85 = scmp.eq.s32.totalorder %s14, 1
      %p86 = scmp.ne.s32.totalorder %s81, %s83
      %p87 = scmp.eq.s32.totalorder %s14, 0
      %p88 = por %p86, %p87
      %p89 = scmp.ne.s32.totalorder %s81, %s83
      %p90 = scmp.eq.s32.totalorder %s19, 1
      %p91 = por %p89, %p90
      %p92 = scmp.ne.s32.totalorder %s83, %s84
      %p93 = scmp.eq.s32.totalorder %s19, 0
      %p94 = por %p92, %p93
      %p95 = scmp.ne.s32.totalorder %s83, %s84
      %p96 = scmp.eq.s32.totalorder %s20, 1
      %p97 = por %p95, %p96
      %p99 = scmp.ne.s32.totalorder %s84, %s98
      %p100 = scmp.eq.s32.totalorder %s20, 0
      %p101 = por %p99, %p100
      %s102 = ssub.s32 %s21, %s33
      %s103 = ssub.s32 %s22, %s29
      %s104 = sor.u32 %s102, %s103
      %p105 = scmp.eq.s32.totalorder %s104, 0
      %s107 = sadd.s32 %s106, 1
      %s108 = scalar_select %p105, %s106, %s107
      %p111 = pneg %p105
      %p112 = scmp.eq.s32.totalorder %s14, 1
      %p113 = por %p111, %p112
      %p114 = scmp.ne.s32.totalorder %s106, %s109
      %p115 = scmp.eq.s32.totalorder %s14, 0
      %p116 = por %p114, %p115
      %p117 = scmp.ne.s32.totalorder %s106, %s109
      %p118 = scmp.eq.s32.totalorder %s19, 1
      %p119 = por %p117, %p118
      %p120 = scmp.ne.s32.totalorder %s109, %s110
      %p121 = scmp.eq.s32.totalorder %s19, 0
      %p122 = por %p120, %p121
      %p123 = scmp.ne.s32.totalorder %s109, %s110
      %p124 = scmp.eq.s32.totalorder %s20, 1
      %p125 = por %p123, %p124
      %p127 = scmp.ne.s32.totalorder %s110, %s126
      %p128 = scmp.eq.s32.totalorder %s20, 0
      %p129 = por %p127, %p128
      %p130 = scmp.le.s32.totalorder 1, %s14
      %p131 = scmp.lt.s32.totalorder %s14, 3
      %p132 = pnand %p130, %p131
      %p133 = pneg %p132
      // Predicated region
      $region9: #{tpu_custom_call.1} parent=5 // pred_check
        _
      $region10: #{tpu_custom_call.1} parent=5 // pred_check_branch
        %135 = sbr.rel (%p132) target = $region12
      $region11: #{tpu_custom_call.1} parent=5 // pred_region
        %s136 = ssub.s32 %s14, 1
        // Predicated region
        $region13: #{tpu_custom_call.1} parent=11 // pred_check
          %p137 = pneg %p73
        $region14: #{tpu_custom_call.1} parent=11 // pred_check_branch
          %139 = sbr.rel (%p137) target = $region16
        $region15: #{tpu_custom_call.1} parent=11 // pred_region
          %141 = vsyncadd [#allocation4], 0
          %s142 = sshll.u32 %s1, 4
          %s143 = int_to_ptr.vmem [resolvable:$true] %s142
          %148 = dma.vmem_to_smem %s143, 512, [#allocation2], [#allocation4], 128, 128, 8
        $region16: #{tpu_custom_call.1} parent=11 // pred_fallthru
          _
        // Predicated region
        $region17: #{tpu_custom_call.1} parent=11 // pred_check
          %p149 = pneg %p94
        $region18: #{tpu_custom_call.1} parent=11 // pred_check_branch
          %151 = sbr.rel (%p149) target = $region20
        $region19: #{tpu_custom_call.1} parent=11 // pred_region
          %153 = vsyncadd [#allocation6], 0
          %s155 = sshll.u32 %s2, 4
          %s156 = int_to_ptr.vmem [resolvable:$true] %s155
          %158 = dma.vmem_to_smem %s156, 16, [#allocation5], [#allocation6]
        $region20: #{tpu_custom_call.1} parent=11 // pred_fallthru
          _
      $region12: #{tpu_custom_call.1} parent=5 // pred_fallthru
        _
      %p159 = scmp.lt.s32.totalorder %s14, 2
      // Predicated region
      $region21: #{tpu_custom_call.1} parent=5 // pred_check
        %p160 = pneg %p159
      $region22: #{tpu_custom_call.1} parent=5 // pred_check_branch
        %162 = sbr.rel (%p160) target = $region24
      $region23: #{tpu_custom_call.1} parent=5 // pred_region
        // Predicated region
        $region25: #{tpu_custom_call.1} parent=23 // pred_check
          %p163 = pneg %p46
        $region26: #{tpu_custom_call.1} parent=23 // pred_check_branch
          %165 = sbr.rel (%p163) target = $region28
        $region27: #{tpu_custom_call.1} parent=23 // pred_region
          %p166 = scmp.lt.s32.totalorder %s21, 1
          %s167 = scalar_select %p166, %s21, 1
          %s168 = smul.addr %s167, 2
          %s169 = smul.addr %s168, 4
          %s170 = scalar_lea.vmem %s0, %s169
        $region28: #{tpu_custom_call.1} parent=23 // pred_fallthru
          _
      $region24: #{tpu_custom_call.1} parent=5 // pred_fallthru
        _
      %p171 = scmp.le.s32.totalorder 1, %s14
      %p172 = scmp.lt.s32.totalorder %s14, 3
      %p173 = pnand %p171, %p172
      %p174 = pneg %p173
      // Predicated region
      $region29: #{tpu_custom_call.1} parent=5 // pred_check
        _
      $region30: #{tpu_custom_call.1} parent=5 // pred_check_branch
        %176 = sbr.rel (%p173) target = $region32
      $region31: #{tpu_custom_call.1} parent=5 // pred_region
        %s177 = ssub.s32 %s14, 1
        // Predicated region
        $region33: #{tpu_custom_call.1} parent=31 // pred_check
          %p178 = pneg %p73
        $region34: #{tpu_custom_call.1} parent=31 // pred_check_branch
          %180 = sbr.rel (%p178) target = $region36
        $region35: #{tpu_custom_call.1} parent=31 // pred_region
          %182 = dma.done [#allocation4], 512
        $region36: #{tpu_custom_call.1} parent=31 // pred_fallthru
          _
        // Predicated region
        $region37: #{tpu_custom_call.1} parent=31 // pred_check
          %p183 = pneg %p94
        $region38: #{tpu_custom_call.1} parent=31 // pred_check_branch
          %185 = sbr.rel (%p183) target = $region40
        $region39: #{tpu_custom_call.1} parent=31 // pred_region
          %187 = dma.done [#allocation6], 16
        $region40: #{tpu_custom_call.1} parent=31 // pred_fallthru
          _
        %188 = sfence
        %p189 = scmp.lt.s32.totalorder %s23, 1
        %s190 = scalar_select %p189, %s23, 1
        %s191 = smul.addr %s190, 2
        %s192 = smul.addr %s191, 4
        %s193 = scalar_lea.vmem %s0, %s192
        %p194 = pneg %p52
        %p195 = pneg %p49
        %p196 = pneg %p73
        %p197 = pneg %p70
        %p198 = pneg %p94
        %p199 = pneg %p91
        %p200 = pneg %p122
        %p201 = pneg %p119
        %s202 = sand.u32 %s109, 1
        %s203 = scalar_lea.sflag [#allocation3], %s202
        %s204 = sand.u32 %s109, 1
        %s205 = smul.addr %s204, 128
        %s206 = scalar_lea.vmem [#allocation7], %s205
        %p207 = scmp.lt.s32.totalorder %s23, 1
        %s208 = scalar_select %p207, %s23, 1
        %s209 = smul.addr %s208, 2
        %s210 = smul.addr %s209, 4
        %s211 = scalar_lea.vmem %s0, %s210
        %s212 = smul.u32 32, %s24
        %v213 = vld [vmem:[%s211] sm:$0xff]
        %s214 = smul.u32 %s24, 32
        %s215 = smul.u32 %s214, 128
        %s216 = sld [smem:[#allocation2 + %s215]]
        %v217 = vstv %s216
        %v218 = vmul.f32 %v217, %v213
        %s219 = sadd.s32 %s215, 1
        %s220 = sld [smem:[#allocation2 + %s219]]
        %v221 = vstv %s220
        %v222 = vmul.f32 %v221, %v213
        %224 = vrot.lane.b32.xlu0 %v222, 127
        %v225 = vpop.permute.xlu0 %224
        %v226 = vrot.slane %v225, 4
        %vm227 = vcmask 1039360
        %v228 = vsel %vm227, %v225, %v226
        %v230 = vadd.f32 %v218, %v228
        %s231 = sadd.s32 %s215, 2
        %s232 = sld [smem:[#allocation2 + %s231]]
        %v233 = vstv %s232
        %v234 = vmul.f32 %v233, %v213
        %236 = vrot.lane.b32.xlu0 %v234, 126
        %v237 = vpop.permute.xlu0 %236
        %v238 = vrot.slane %v237, 4
        %vm239 = vcmask 1031168
        %v240 = vsel %vm239, %v237, %v238
        %v242 = vadd.f32 %v230, %v240
        %s243 = sld [smem:[#allocation5 + %s214]]
        %v244 = vstv %s243
        %vm245 = vcmp.gt.f32.partialorder %v242, %v244
        %v246 = vsel %vm245, 1, 0
        %v247 = vcvt.s32.f32 %v246
        %248 = vst [vmem:[%s206] sm:$0xf] %v247
        %s249 = sadd.s32 %s214, 1
        %s250 = smul.u32 %s249, 128
        %s251 = sld [smem:[#allocation2 + %s250]]
        %v252 = vstv %s251
        %v253 = vmul.f32 %v252, %v213
        %s254 = sadd.s32 %s250, 1
        %s255 = sld [smem:[#allocation2 + %s254]]
        %v256 = vstv %s255
        %v257 = vmul.f32 %v256, %v213
        %259 = vrot.lane.b32.xlu0 %v257, 127
        %v260 = vpop.permute.xlu0 %259
        %v261 = vrot.slane %v260, 4
        %v262 = vsel %vm227, %v260, %v261
        %v264 = vadd.f32 %v253, %v262
        %s265 = sadd.s32 %s250, 2
        %s266 = sld [smem:[#allocation2 + %s265]]
        %v267 = vstv %s266
        %v268 = vmul.f32 %v267, %v213
        %270 = vrot.lane.b32.xlu0 %v268, 126
        %v271 = vpop.permute.xlu0 %270
        %v272 = vrot.slane %v271, 4
        %v273 = vsel %vm239, %v271, %v272
        %v275 = vadd.f32 %v264, %v273
        %s276 = sld [smem:[#allocation5 + %s249]]
        %v277 = vstv %s276
        %vm278 = vcmp.gt.f32.partialorder %v275, %v277
        %v279 = vsel %vm278, 1, 0
        %v280 = vcvt.s32.f32 %v279
        %s281 = scalar_lea.vmem %s206, 4 [#allocation7]
        %282 = vst [vmem:[%s281] sm:$0xf] %v280
        %s283 = sadd.s32 %s214, 2
        %s284 = smul.u32 %s283, 128
        %s285 = sld [smem:[#allocation2 + %s284]]
        %v286 = vstv %s285
        %v287 = vmul.f32 %v286, %v213
        %s288 = sadd.s32 %s284, 1
        %s289 = sld [smem:[#allocation2 + %s288]]
        %v290 = vstv %s289
        %v291 = vmul.f32 %v290, %v213
        %293 = vrot.lane.b32.xlu0 %v291, 127
        %v294 = vpop.permute.xlu0 %293
        %v295 = vrot.slane %v294, 4
        %v296 = vsel %vm227, %v294, %v295
        %v298 = vadd.f32 %v287, %v296
        %s299 = sadd.s32 %s284, 2
        %s300 = sld [smem:[#allocation2 + %s299]]
        %v301 = vstv %s300
        %v302 = vmul.f32 %v301, %v213
        %304 = vrot.lane.b32.xlu0 %v302, 126
        %v305 = vpop.permute.xlu0 %304
        %v306 = vrot.slane %v305, 4
        %v307 = vsel %vm239, %v305, %v306
        %v309 = vadd.f32 %v298, %v307
        %s310 = sld [smem:[#allocation5 + %s283]]
        %v311 = vstv %s310
        %vm312 = vcmp.gt.f32.partialorder %v309, %v311
        %v313 = vsel %vm312, 1, 0
        %v314 = vcvt.s32.f32 %v313
        %s315 = scalar_lea.vmem %s206, 8 [#allocation7]
        %316 = vst [vmem:[%s315] sm:$0xf] %v314
        %s317 = sadd.s32 %s214, 3
        %s318 = smul.u32 %s317, 128
        %s319 = sld [smem:[#allocation2 + %s318]]
        %v320 = vstv %s319
        %v321 = vmul.f32 %v320, %v213
        %s322 = sadd.s32 %s318, 1
        %s323 = sld [smem:[#allocation2 + %s322]]
        %v324 = vstv %s323
        %v325 = vmul.f32 %v324, %v213
        %327 = vrot.lane.b32.xlu0 %v325, 127
        %v328 = vpop.permute.xlu0 %327
        %v329 = vrot.slane %v328, 4
        %v330 = vsel %vm227, %v328, %v329
        %v332 = vadd.f32 %v321, %v330
        %s333 = sadd.s32 %s318, 2
        %s334 = sld [smem:[#allocation2 + %s333]]
        %v335 = vstv %s334
        %v336 = vmul.f32 %v335, %v213
        %338 = vrot.lane.b32.xlu0 %v336, 126
        %v339 = vpop.permute.xlu0 %338
        %v340 = vrot.slane %v339, 4
        %v341 = vsel %vm239, %v339, %v340
        %v343 = vadd.f32 %v332, %v341
        %s344 = sld [smem:[#allocation5 + %s317]]
        %v345 = vstv %s344
        %vm346 = vcmp.gt.f32.partialorder %v343, %v345
        %v347 = vsel %vm346, 1, 0
        %v348 = vcvt.s32.f32 %v347
        %s349 = scalar_lea.vmem %s206, 12 [#allocation7]
        %350 = vst [vmem:[%s349] sm:$0xf] %v348
        %s351 = sadd.s32 %s214, 4
        %s352 = smul.u32 %s351, 128
        %s353 = sld [smem:[#allocation2 + %s352]]
        %v354 = vstv %s353
        %v355 = vmul.f32 %v354, %v213
        %s356 = sadd.s32 %s352, 1
        %s357 = sld [smem:[#allocation2 + %s356]]
        %v358 = vstv %s357
        %v359 = vmul.f32 %v358, %v213
        %361 = vrot.lane.b32.xlu0 %v359, 127
        %v362 = vpop.permute.xlu0 %361
        %v363 = vrot.slane %v362, 4
        %v364 = vsel %vm227, %v362, %v363
        %v366 = vadd.f32 %v355, %v364
        %s367 = sadd.s32 %s352, 2
        %s368 = sld [smem:[#allocation2 + %s367]]
        %v369 = vstv %s368
        %v370 = vmul.f32 %v369, %v213
        %372 = vrot.lane.b32.xlu0 %v370, 126
        %v373 = vpop.permute.xlu0 %372
        %v374 = vrot.slane %v373, 4
        %v375 = vsel %vm239, %v373, %v374
        %v377 = vadd.f32 %v366, %v375
        %s378 = sld [smem:[#allocation5 + %s351]]
        %v379 = vstv %s378
        %vm380 = vcmp.gt.f32.partialorder %v377, %v379
        %v381 = vsel %vm380, 1, 0
        %v382 = vcvt.s32.f32 %v381
        %s383 = scalar_lea.vmem %s206, 16 [#allocation7]
        %384 = vst [vmem:[%s383] sm:$0xf] %v382
        %s385 = sadd.s32 %s214, 5
        %s386 = smul.u32 %s385, 128
        %s387 = sld [smem:[#allocation2 + %s386]]
        %v388 = vstv %s387
        %v389 = vmul.f32 %v388, %v213
        %s390 = sadd.s32 %s386, 1
        %s391 = sld [smem:[#allocation2 + %s390]]
        %v392 = vstv %s391
        %v393 = vmul.f32 %v392, %v213
        %395 = vrot.lane.b32.xlu0 %v393, 127
        %v396 = vpop.permute.xlu0 %395
        %v397 = vrot.slane %v396, 4
        %v398 = vsel %vm227, %v396, %v397
        %v400 = vadd.f32 %v389, %v398
        %s401 = sadd.s32 %s386, 2
        %s402 = sld [smem:[#allocation2 + %s401]]
        %v403 = vstv %s402
        %v404 = vmul.f32 %v403, %v213
        %406 = vrot.lane.b32.xlu0 %v404, 126
        %v407 = vpop.permute.xlu0 %406
        %v408 = vrot.slane %v407, 4
        %v409 = vsel %vm239, %v407, %v408
        %v411 = vadd.f32 %v400, %v409
        %s412 = sld [smem:[#allocation5 + %s385]]
        %v413 = vstv %s412
        %vm414 = vcmp.gt.f32.partialorder %v411, %v413
        %v415 = vsel %vm414, 1, 0
        %v416 = vcvt.s32.f32 %v415
        %s417 = scalar_lea.vmem %s206, 20 [#allocation7]
        %418 = vst [vmem:[%s417] sm:$0xf] %v416
        %s419 = sadd.s32 %s214, 6
        %s420 = smul.u32 %s419, 128
        %s421 = sld [smem:[#allocation2 + %s420]]
        %v422 = vstv %s421
        %v423 = vmul.f32 %v422, %v213
        %s424 = sadd.s32 %s420, 1
        %s425 = sld [smem:[#allocation2 + %s424]]
        %v426 = vstv %s425
        %v427 = vmul.f32 %v426, %v213
        %429 = vrot.lane.b32.xlu0 %v427, 127
        %v430 = vpop.permute.xlu0 %429
        %v431 = vrot.slane %v430, 4
        %v432 = vsel %vm227, %v430, %v431
        %v434 = vadd.f32 %v423, %v432
        %s435 = sadd.s32 %s420, 2
        %s436 = sld [smem:[#allocation2 + %s435]]
        %v437 = vstv %s436
        %v438 = vmul.f32 %v437, %v213
        %440 = vrot.lane.b32.xlu0 %v438, 126
        %v441 = vpop.permute.xlu0 %440
        %v442 = vrot.slane %v441, 4
        %v443 = vsel %vm239, %v441, %v442
        %v445 = vadd.f32 %v434, %v443
        %s446 = sld [smem:[#allocation5 + %s419]]
        %v447 = vstv %s446
        %vm448 = vcmp.gt.f32.partialorder %v445, %v447
        %v449 = vsel %vm448, 1, 0
        %v450 = vcvt.s32.f32 %v449
        %s451 = scalar_lea.vmem %s206, 24 [#allocation7]
        %452 = vst [vmem:[%s451] sm:$0xf] %v450
        %s453 = sadd.s32 %s214, 7
        %s454 = smul.u32 %s453, 128
        %s455 = sld [smem:[#allocation2 + %s454]]
        %v456 = vstv %s455
        %v457 = vmul.f32 %v456, %v213
        %s458 = sadd.s32 %s454, 1
        %s459 = sld [smem:[#allocation2 + %s458]]
        %v460 = vstv %s459
        %v461 = vmul.f32 %v460, %v213
        %463 = vrot.lane.b32.xlu0 %v461, 127
        %v464 = vpop.permute.xlu0 %463
        %v465 = vrot.slane %v464, 4
        %v466 = vsel %vm227, %v464, %v465
        %v468 = vadd.f32 %v457, %v466
        %s469 = sadd.s32 %s454, 2
        %s470 = sld [smem:[#allocation2 + %s469]]
        %v471 = vstv %s470
        %v472 = vmul.f32 %v471, %v213
        %474 = vrot.lane.b32.xlu0 %v472, 126
        %v475 = vpop.permute.xlu0 %474
        %v476 = vrot.slane %v475, 4
        %v477 = vsel %vm239, %v475, %v476
        %v479 = vadd.f32 %v468, %v477
        %s480 = sld [smem:[#allocation5 + %s453]]
        %v481 = vstv %s480
        %vm482 = vcmp.gt.f32.partialorder %v479, %v481
        %v483 = vsel %vm482, 1, 0
        %v484 = vcvt.s32.f32 %v483
        %s485 = scalar_lea.vmem %s206, 28 [#allocation7]
        %486 = vst [vmem:[%s485] sm:$0xf] %v484
        %s487 = sadd.s32 %s214, 8
        %s488 = smul.u32 %s487, 128
        %s489 = sld [smem:[#allocation2 + %s488]]
        %v490 = vstv %s489
        %v491 = vmul.f32 %v490, %v213
        %s492 = sadd.s32 %s488, 1
        %s493 = sld [smem:[#allocation2 + %s492]]
        %v494 = vstv %s493
        %v495 = vmul.f32 %v494, %v213
        %497 = vrot.lane.b32.xlu0 %v495, 127
        %v498 = vpop.permute.xlu0 %497
        %v499 = vrot.slane %v498, 4
        %v500 = vsel %vm227, %v498, %v499
        %v502 = vadd.f32 %v491, %v500
        %s503 = sadd.s32 %s488, 2
        %s504 = sld [smem:[#allocation2 + %s503]]
        %v505 = vstv %s504
        %v506 = vmul.f32 %v505, %v213
        %508 = vrot.lane.b32.xlu0 %v506, 126
        %v509 = vpop.permute.xlu0 %508
        %v510 = vrot.slane %v509, 4
        %v511 = vsel %vm239, %v509, %v510
        %v513 = vadd.f32 %v502, %v511
        %s514 = sld [smem:[#allocation5 + %s487]]
        %v515 = vstv %s514
        %vm516 = vcmp.gt.f32.partialorder %v513, %v515
        %v517 = vsel %vm516, 1, 0
        %v518 = vcvt.s32.f32 %v517
        %s519 = scalar_lea.vmem %s206, 32 [#allocation7]
        %520 = vst [vmem:[%s519] sm:$0xf] %v518
        %s521 = sadd.s32 %s214, 9
        %s522 = smul.u32 %s521, 128
        %s523 = sld [smem:[#allocation2 + %s522]]
        %v524 = vstv %s523
        %v525 = vmul.f32 %v524, %v213
        %s526 = sadd.s32 %s522, 1
        %s527 = sld [smem:[#allocation2 + %s526]]
        %v528 = vstv %s527
        %v529 = vmul.f32 %v528, %v213
        %531 = vrot.lane.b32.xlu0 %v529, 127
        %v532 = vpop.permute.xlu0 %531
        %v533 = vrot.slane %v532, 4
        %v534 = vsel %vm227, %v532, %v533
        %v536 = vadd.f32 %v525, %v534
        %s537 = sadd.s32 %s522, 2
        %s538 = sld [smem:[#allocation2 + %s537]]
        %v539 = vstv %s538
        %v540 = vmul.f32 %v539, %v213
        %542 = vrot.lane.b32.xlu0 %v540, 126
        %v543 = vpop.permute.xlu0 %542
        %v544 = vrot.slane %v543, 4
        %v545 = vsel %vm239, %v543, %v544
        %v547 = vadd.f32 %v536, %v545
        %s548 = sld [smem:[#allocation5 + %s521]]
        %v549 = vstv %s548
        %vm550 = vcmp.gt.f32.partialorder %v547, %v549
        %v551 = vsel %vm550, 1, 0
        %v552 = vcvt.s32.f32 %v551
        %s553 = scalar_lea.vmem %s206, 36 [#allocation7]
        %554 = vst [vmem:[%s553] sm:$0xf] %v552
        %s555 = sadd.s32 %s214, 10
        %s556 = smul.u32 %s555, 128
        %s557 = sld [smem:[#allocation2 + %s556]]
        %v558 = vstv %s557
        %v559 = vmul.f32 %v558, %v213
        %s560 = sadd.s32 %s556, 1
        %s561 = sld [smem:[#allocation2 + %s560]]
        %v562 = vstv %s561
        %v563 = vmul.f32 %v562, %v213
        %565 = vrot.lane.b32.xlu0 %v563, 127
        %v566 = vpop.permute.xlu0 %565
        %v567 = vrot.slane %v566, 4
        %v568 = vsel %vm227, %v566, %v567
        %v570 = vadd.f32 %v559, %v568
        %s571 = sadd.s32 %s556, 2
        %s572 = sld [smem:[#allocation2 + %s571]]
        %v573 = vstv %s572
        %v574 = vmul.f32 %v573, %v213
        %576 = vrot.lane.b32.xlu0 %v574, 126
        %v577 = vpop.permute.xlu0 %576
        %v578 = vrot.slane %v577, 4
        %v579 = vsel %vm239, %v577, %v578
        %v581 = vadd.f32 %v570, %v579
        %s582 = sld [smem:[#allocation5 + %s555]]
        %v583 = vstv %s582
        %vm584 = vcmp.gt.f32.partialorder %v581, %v583
        %v585 = vsel %vm584, 1, 0
        %v586 = vcvt.s32.f32 %v585
        %s587 = scalar_lea.vmem %s206, 40 [#allocation7]
        %588 = vst [vmem:[%s587] sm:$0xf] %v586
        %s589 = sadd.s32 %s214, 11
        %s590 = smul.u32 %s589, 128
        %s591 = sld [smem:[#allocation2 + %s590]]
        %v592 = vstv %s591
        %v593 = vmul.f32 %v592, %v213
        %s594 = sadd.s32 %s590, 1
        %s595 = sld [smem:[#allocation2 + %s594]]
        %v596 = vstv %s595
        %v597 = vmul.f32 %v596, %v213
        %599 = vrot.lane.b32.xlu0 %v597, 127
        %v600 = vpop.permute.xlu0 %599
        %v601 = vrot.slane %v600, 4
        %v602 = vsel %vm227, %v600, %v601
        %v604 = vadd.f32 %v593, %v602
        %s605 = sadd.s32 %s590, 2
        %s606 = sld [smem:[#allocation2 + %s605]]
        %v607 = vstv %s606
        %v608 = vmul.f32 %v607, %v213
        %610 = vrot.lane.b32.xlu0 %v608, 126
        %v611 = vpop.permute.xlu0 %610
        %v612 = vrot.slane %v611, 4
        %v613 = vsel %vm239, %v611, %v612
        %v615 = vadd.f32 %v604, %v613
        %s616 = sld [smem:[#allocation5 + %s589]]
        %v617 = vstv %s616
        %vm618 = vcmp.gt.f32.partialorder %v615, %v617
        %v619 = vsel %vm618, 1, 0
        %v620 = vcvt.s32.f32 %v619
        %s621 = scalar_lea.vmem %s206, 44 [#allocation7]
        %622 = vst [vmem:[%s621] sm:$0xf] %v620
        %s623 = sadd.s32 %s214, 12
        %s624 = smul.u32 %s623, 128
        %s625 = sld [smem:[#allocation2 + %s624]]
        %v626 = vstv %s625
        %v627 = vmul.f32 %v626, %v213
        %s628 = sadd.s32 %s624, 1
        %s629 = sld [smem:[#allocation2 + %s628]]
        %v630 = vstv %s629
        %v631 = vmul.f32 %v630, %v213
        %633 = vrot.lane.b32.xlu0 %v631, 127
        %v634 = vpop.permute.xlu0 %633
        %v635 = vrot.slane %v634, 4
        %v636 = vsel %vm227, %v634, %v635
        %v638 = vadd.f32 %v627, %v636
        %s639 = sadd.s32 %s624, 2
        %s640 = sld [smem:[#allocation2 + %s639]]
        %v641 = vstv %s640
        %v642 = vmul.f32 %v641, %v213
        %644 = vrot.lane.b32.xlu0 %v642, 126
        %v645 = vpop.permute.xlu0 %644
        %v646 = vrot.slane %v645, 4
        %v647 = vsel %vm239, %v645, %v646
        %v649 = vadd.f32 %v638, %v647
        %s650 = sld [smem:[#allocation5 + %s623]]
        %v651 = vstv %s650
        %vm652 = vcmp.gt.f32.partialorder %v649, %v651
        %v653 = vsel %vm652, 1, 0
        %v654 = vcvt.s32.f32 %v653
        %s655 = scalar_lea.vmem %s206, 48 [#allocation7]
        %656 = vst [vmem:[%s655] sm:$0xf] %v654
        %s657 = sadd.s32 %s214, 13
        %s658 = smul.u32 %s657, 128
        %s659 = sld [smem:[#allocation2 + %s658]]
        %v660 = vstv %s659
        %v661 = vmul.f32 %v660, %v213
        %s662 = sadd.s32 %s658, 1
        %s663 = sld [smem:[#allocation2 + %s662]]
        %v664 = vstv %s663
        %v665 = vmul.f32 %v664, %v213
        %667 = vrot.lane.b32.xlu0 %v665, 127
        %v668 = vpop.permute.xlu0 %667
        %v669 = vrot.slane %v668, 4
        %v670 = vsel %vm227, %v668, %v669
        %v672 = vadd.f32 %v661, %v670
        %s673 = sadd.s32 %s658, 2
        %s674 = sld [smem:[#allocation2 + %s673]]
        %v675 = vstv %s674
        %v676 = vmul.f32 %v675, %v213
        %678 = vrot.lane.b32.xlu0 %v676, 126
        %v679 = vpop.permute.xlu0 %678
        %v680 = vrot.slane %v679, 4
        %v681 = vsel %vm239, %v679, %v680
        %v683 = vadd.f32 %v672, %v681
        %s684 = sld [smem:[#allocation5 + %s657]]
        %v685 = vstv %s684
        %vm686 = vcmp.gt.f32.partialorder %v683, %v685
        %v687 = vsel %vm686, 1, 0
        %v688 = vcvt.s32.f32 %v687
        %s689 = scalar_lea.vmem %s206, 52 [#allocation7]
        %690 = vst [vmem:[%s689] sm:$0xf] %v688
        %s691 = sadd.s32 %s214, 14
        %s692 = smul.u32 %s691, 128
        %s693 = sld [smem:[#allocation2 + %s692]]
        %v694 = vstv %s693
        %v695 = vmul.f32 %v694, %v213
        %s696 = sadd.s32 %s692, 1
        %s697 = sld [smem:[#allocation2 + %s696]]
        %v698 = vstv %s697
        %v699 = vmul.f32 %v698, %v213
        %701 = vrot.lane.b32.xlu0 %v699, 127
        %v702 = vpop.permute.xlu0 %701
        %v703 = vrot.slane %v702, 4
        %v704 = vsel %vm227, %v702, %v703
        %v706 = vadd.f32 %v695, %v704
        %s707 = sadd.s32 %s692, 2
        %s708 = sld [smem:[#allocation2 + %s707]]
        %v709 = vstv %s708
        %v710 = vmul.f32 %v709, %v213
        %712 = vrot.lane.b32.xlu0 %v710, 126
        %v713 = vpop.permute.xlu0 %712
        %v714 = vrot.slane %v713, 4
        %v715 = vsel %vm239, %v713, %v714
        %v717 = vadd.f32 %v706, %v715
        %s718 = sld [smem:[#allocation5 + %s691]]
        %v719 = vstv %s718
        %vm720 = vcmp.gt.f32.partialorder %v717, %v719
        %v721 = vsel %vm720, 1, 0
        %v722 = vcvt.s32.f32 %v721
        %s723 = scalar_lea.vmem %s206, 56 [#allocation7]
        %724 = vst [vmem:[%s723] sm:$0xf] %v722
        %s725 = sadd.s32 %s214, 15
        %s726 = smul.u32 %s725, 128
        %s727 = sld [smem:[#allocation2 + %s726]]
        %v728 = vstv %s727
        %v729 = vmul.f32 %v728, %v213
        %s730 = sadd.s32 %s726, 1
        %s731 = sld [smem:[#allocation2 + %s730]]
        %v732 = vstv %s731
        %v733 = vmul.f32 %v732, %v213
        %735 = vrot.lane.b32.xlu0 %v733, 127
        %v736 = vpop.permute.xlu0 %735
        %v737 = vrot.slane %v736, 4
        %v738 = vsel %vm227, %v736, %v737
        %v740 = vadd.f32 %v729, %v738
        %s741 = sadd.s32 %s726, 2
        %s742 = sld [smem:[#allocation2 + %s741]]
        %v743 = vstv %s742
        %v744 = vmul.f32 %v743, %v213
        %746 = vrot.lane.b32.xlu0 %v744, 126
        %v747 = vpop.permute.xlu0 %746
        %v748 = vrot.slane %v747, 4
        %v749 = vsel %vm239, %v747, %v748
        %v751 = vadd.f32 %v740, %v749
        %s752 = sld [smem:[#allocation5 + %s725]]
        %v753 = vstv %s752
        %vm754 = vcmp.gt.f32.partialorder %v751, %v753
        %v755 = vsel %vm754, 1, 0
        %v756 = vcvt.s32.f32 %v755
        %s757 = scalar_lea.vmem %s206, 60 [#allocation7]
        %758 = vst [vmem:[%s757] sm:$0xf] %v756
        %s759 = sadd.s32 %s214, 16
        %s760 = smul.u32 %s759, 128
        %s761 = sld [smem:[#allocation2 + %s760]]
        %v762 = vstv %s761
        %v763 = vmul.f32 %v762, %v213
        %s764 = sadd.s32 %s760, 1
        %s765 = sld [smem:[#allocation2 + %s764]]
        %v766 = vstv %s765
        %v767 = vmul.f32 %v766, %v213
        %769 = vrot.lane.b32.xlu0 %v767, 127
        %v770 = vpop.permute.xlu0 %769
        %v771 = vrot.slane %v770, 4
        %v772 = vsel %vm227, %v770, %v771
        %v774 = vadd.f32 %v763, %v772
        %s775 = sadd.s32 %s760, 2
        %s776 = sld [smem:[#allocation2 + %s775]]
        %v777 = vstv %s776
        %v778 = vmul.f32 %v777, %v213
        %780 = vrot.lane.b32.xlu0 %v778, 126
        %v781 = vpop.permute.xlu0 %780
        %v782 = vrot.slane %v781, 4
        %v783 = vsel %vm239, %v781, %v782
        %v785 = vadd.f32 %v774, %v783
        %s786 = sld [smem:[#allocation5 + %s759]]
        %v787 = vstv %s786
        %vm788 = vcmp.gt.f32.partialorder %v785, %v787
        %v789 = vsel %vm788, 1, 0
        %v790 = vcvt.s32.f32 %v789
        %s791 = scalar_lea.vmem %s206, 64 [#allocation7]
        %792 = vst [vmem:[%s791] sm:$0xf] %v790
        %s793 = sadd.s32 %s214, 17
        %s794 = smul.u32 %s793, 128
        %s795 = sld [smem:[#allocation2 + %s794]]
        %v796 = vstv %s795
        %v797 = vmul.f32 %v796, %v213
        %s798 = sadd.s32 %s794, 1
        %s799 = sld [smem:[#allocation2 + %s798]]
        %v800 = vstv %s799
        %v801 = vmul.f32 %v800, %v213
        %803 = vrot.lane.b32.xlu0 %v801, 127
        %v804 = vpop.permute.xlu0 %803
        %v805 = vrot.slane %v804, 4
        %v806 = vsel %vm227, %v804, %v805
        %v808 = vadd.f32 %v797, %v806
        %s809 = sadd.s32 %s794, 2
        %s810 = sld [smem:[#allocation2 + %s809]]
        %v811 = vstv %s810
        %v812 = vmul.f32 %v811, %v213
        %814 = vrot.lane.b32.xlu0 %v812, 126
        %v815 = vpop.permute.xlu0 %814
        %v816 = vrot.slane %v815, 4
        %v817 = vsel %vm239, %v815, %v816
        %v819 = vadd.f32 %v808, %v817
        %s820 = sld [smem:[#allocation5 + %s793]]
        %v821 = vstv %s820
        %vm822 = vcmp.gt.f32.partialorder %v819, %v821
        %v823 = vsel %vm822, 1, 0
        %v824 = vcvt.s32.f32 %v823
        %s825 = scalar_lea.vmem %s206, 68 [#allocation7]
        %826 = vst [vmem:[%s825] sm:$0xf] %v824
        %s827 = sadd.s32 %s214, 18
        %s828 = smul.u32 %s827, 128
        %s829 = sld [smem:[#allocation2 + %s828]]
        %v830 = vstv %s829
        %v831 = vmul.f32 %v830, %v213
        %s832 = sadd.s32 %s828, 1
        %s833 = sld [smem:[#allocation2 + %s832]]
        %v834 = vstv %s833
        %v835 = vmul.f32 %v834, %v213
        %837 = vrot.lane.b32.xlu0 %v835, 127
        %v838 = vpop.permute.xlu0 %837
        %v839 = vrot.slane %v838, 4
        %v840 = vsel %vm227, %v838, %v839
        %v842 = vadd.f32 %v831, %v840
        %s843 = sadd.s32 %s828, 2
        %s844 = sld [smem:[#allocation2 + %s843]]
        %v845 = vstv %s844
        %v846 = vmul.f32 %v845, %v213
        %848 = vrot.lane.b32.xlu0 %v846, 126
        %v849 = vpop.permute.xlu0 %848
        %v850 = vrot.slane %v849, 4
        %v851 = vsel %vm239, %v849, %v850
        %v853 = vadd.f32 %v842, %v851
        %s854 = sld [smem:[#allocation5 + %s827]]
        %v855 = vstv %s854
        %vm856 = vcmp.gt.f32.partialorder %v853, %v855
        %v857 = vsel %vm856, 1, 0
        %v858 = vcvt.s32.f32 %v857
        %s859 = scalar_lea.vmem %s206, 72 [#allocation7]
        %860 = vst [vmem:[%s859] sm:$0xf] %v858
        %s861 = sadd.s32 %s214, 19
        %s862 = smul.u32 %s861, 128
        %s863 = sld [smem:[#allocation2 + %s862]]
        %v864 = vstv %s863
        %v865 = vmul.f32 %v864, %v213
        %s866 = sadd.s32 %s862, 1
        %s867 = sld [smem:[#allocation2 + %s866]]
        %v868 = vstv %s867
        %v869 = vmul.f32 %v868, %v213
        %871 = vrot.lane.b32.xlu0 %v869, 127
        %v872 = vpop.permute.xlu0 %871
        %v873 = vrot.slane %v872, 4
        %v874 = vsel %vm227, %v872, %v873
        %v876 = vadd.f32 %v865, %v874
        %s877 = sadd.s32 %s862, 2
        %s878 = sld [smem:[#allocation2 + %s877]]
        %v879 = vstv %s878
        %v880 = vmul.f32 %v879, %v213
        %882 = vrot.lane.b32.xlu0 %v880, 126
        %v883 = vpop.permute.xlu0 %882
        %v884 = vrot.slane %v883, 4
        %v885 = vsel %vm239, %v883, %v884
        %v887 = vadd.f32 %v876, %v885
        %s888 = sld [smem:[#allocation5 + %s861]]
        %v889 = vstv %s888
        %vm890 = vcmp.gt.f32.partialorder %v887, %v889
        %v891 = vsel %vm890, 1, 0
        %v892 = vcvt.s32.f32 %v891
        %s893 = scalar_lea.vmem %s206, 76 [#allocation7]
        %894 = vst [vmem:[%s893] sm:$0xf] %v892
        %s895 = sadd.s32 %s214, 20
        %s896 = smul.u32 %s895, 128
        %s897 = sld [smem:[#allocation2 + %s896]]
        %v898 = vstv %s897
        %v899 = vmul.f32 %v898, %v213
        %s900 = sadd.s32 %s896, 1
        %s901 = sld [smem:[#allocation2 + %s900]]
        %v902 = vstv %s901
        %v903 = vmul.f32 %v902, %v213
        %905 = vrot.lane.b32.xlu0 %v903, 127
        %v906 = vpop.permute.xlu0 %905
        %v907 = vrot.slane %v906, 4
        %v908 = vsel %vm227, %v906, %v907
        %v910 = vadd.f32 %v899, %v908
        %s911 = sadd.s32 %s896, 2
        %s912 = sld [smem:[#allocation2 + %s911]]
        %v913 = vstv %s912
        %v914 = vmul.f32 %v913, %v213
        %916 = vrot.lane.b32.xlu0 %v914, 126
        %v917 = vpop.permute.xlu0 %916
        %v918 = vrot.slane %v917, 4
        %v919 = vsel %vm239, %v917, %v918
        %v921 = vadd.f32 %v910, %v919
        %s922 = sld [smem:[#allocation5 + %s895]]
        %v923 = vstv %s922
        %vm924 = vcmp.gt.f32.partialorder %v921, %v923
        %v925 = vsel %vm924, 1, 0
        %v926 = vcvt.s32.f32 %v925
        %s927 = scalar_lea.vmem %s206, 80 [#allocation7]
        %928 = vst [vmem:[%s927] sm:$0xf] %v926
        %s929 = sadd.s32 %s214, 21
        %s930 = smul.u32 %s929, 128
        %s931 = sld [smem:[#allocation2 + %s930]]
        %v932 = vstv %s931
        %v933 = vmul.f32 %v932, %v213
        %s934 = sadd.s32 %s930, 1
        %s935 = sld [smem:[#allocation2 + %s934]]
        %v936 = vstv %s935
        %v937 = vmul.f32 %v936, %v213
        %939 = vrot.lane.b32.xlu0 %v937, 127
        %v940 = vpop.permute.xlu0 %939
        %v941 = vrot.slane %v940, 4
        %v942 = vsel %vm227, %v940, %v941
        %v944 = vadd.f32 %v933, %v942
        %s945 = sadd.s32 %s930, 2
        %s946 = sld [smem:[#allocation2 + %s945]]
        %v947 = vstv %s946
        %v948 = vmul.f32 %v947, %v213
        %950 = vrot.lane.b32.xlu0 %v948, 126
        %v951 = vpop.permute.xlu0 %950
        %v952 = vrot.slane %v951, 4
        %v953 = vsel %vm239, %v951, %v952
        %v955 = vadd.f32 %v944, %v953
        %s956 = sld [smem:[#allocation5 + %s929]]
        %v957 = vstv %s956
        %vm958 = vcmp.gt.f32.partialorder %v955, %v957
        %v959 = vsel %vm958, 1, 0
        %v960 = vcvt.s32.f32 %v959
        %s961 = scalar_lea.vmem %s206, 84 [#allocation7]
        %962 = vst [vmem:[%s961] sm:$0xf] %v960
        %s963 = sadd.s32 %s214, 22
        %s964 = smul.u32 %s963, 128
        %s965 = sld [smem:[#allocation2 + %s964]]
        %v966 = vstv %s965
        %v967 = vmul.f32 %v966, %v213
        %s968 = sadd.s32 %s964, 1
        %s969 = sld [smem:[#allocation2 + %s968]]
        %v970 = vstv %s969
        %v971 = vmul.f32 %v970, %v213
        %973 = vrot.lane.b32.xlu0 %v971, 127
        %v974 = vpop.permute.xlu0 %973
        %v975 = vrot.slane %v974, 4
        %v976 = vsel %vm227, %v974, %v975
        %v978 = vadd.f32 %v967, %v976
        %s979 = sadd.s32 %s964, 2
        %s980 = sld [smem:[#allocation2 + %s979]]
        %v981 = vstv %s980
        %v982 = vmul.f32 %v981, %v213
        %984 = vrot.lane.b32.xlu0 %v982, 126
        %v985 = vpop.permute.xlu0 %984
        %v986 = vrot.slane %v985, 4
        %v987 = vsel %vm239, %v985, %v986
        %v989 = vadd.f32 %v978, %v987
        %s990 = sld [smem:[#allocation5 + %s963]]
        %v991 = vstv %s990
        %vm992 = vcmp.gt.f32.partialorder %v989, %v991
        %v993 = vsel %vm992, 1, 0
        %v994 = vcvt.s32.f32 %v993
        %s995 = scalar_lea.vmem %s206, 88 [#allocation7]
        %996 = vst [vmem:[%s995] sm:$0xf] %v994
        %s997 = sadd.s32 %s214, 23
        %s998 = smul.u32 %s997, 128
        %s999 = sld [smem:[#allocation2 + %s998]]
        %v1000 = vstv %s999
        %v1001 = vmul.f32 %v1000, %v213
        %s1002 = sadd.s32 %s998, 1
        %s1003 = sld [smem:[#allocation2 + %s1002]]
        %v1004 = vstv %s1003
        %v1005 = vmul.f32 %v1004, %v213
        %1007 = vrot.lane.b32.xlu0 %v1005, 127
        %v1008 = vpop.permute.xlu0 %1007
        %v1009 = vrot.slane %v1008, 4
        %v1010 = vsel %vm227, %v1008, %v1009
        %v1012 = vadd.f32 %v1001, %v1010
        %s1013 = sadd.s32 %s998, 2
        %s1014 = sld [smem:[#allocation2 + %s1013]]
        %v1015 = vstv %s1014
        %v1016 = vmul.f32 %v1015, %v213
        %1018 = vrot.lane.b32.xlu0 %v1016, 126
        %v1019 = vpop.permute.xlu0 %1018
        %v1020 = vrot.slane %v1019, 4
        %v1021 = vsel %vm239, %v1019, %v1020
        %v1023 = vadd.f32 %v1012, %v1021
        %s1024 = sld [smem:[#allocation5 + %s997]]
        %v1025 = vstv %s1024
        %vm1026 = vcmp.gt.f32.partialorder %v1023, %v1025
        %v1027 = vsel %vm1026, 1, 0
        %v1028 = vcvt.s32.f32 %v1027
        %s1029 = scalar_lea.vmem %s206, 92 [#allocation7]
        %1030 = vst [vmem:[%s1029] sm:$0xf] %v1028
        %s1031 = sadd.s32 %s214, 24
        %s1032 = smul.u32 %s1031, 128
        %s1033 = sld [smem:[#allocation2 + %s1032]]
        %v1034 = vstv %s1033
        %v1035 = vmul.f32 %v1034, %v213
        %s1036 = sadd.s32 %s1032, 1
        %s1037 = sld [smem:[#allocation2 + %s1036]]
        %v1038 = vstv %s1037
        %v1039 = vmul.f32 %v1038, %v213
        %1041 = vrot.lane.b32.xlu0 %v1039, 127
        %v1042 = vpop.permute.xlu0 %1041
        %v1043 = vrot.slane %v1042, 4
        %v1044 = vsel %vm227, %v1042, %v1043
        %v1046 = vadd.f32 %v1035, %v1044
        %s1047 = sadd.s32 %s1032, 2
        %s1048 = sld [smem:[#allocation2 + %s1047]]
        %v1049 = vstv %s1048
        %v1050 = vmul.f32 %v1049, %v213
        %1052 = vrot.lane.b32.xlu0 %v1050, 126
        %v1053 = vpop.permute.xlu0 %1052
        %v1054 = vrot.slane %v1053, 4
        %v1055 = vsel %vm239, %v1053, %v1054
        %v1057 = vadd.f32 %v1046, %v1055
        %s1058 = sld [smem:[#allocation5 + %s1031]]
        %v1059 = vstv %s1058
        %vm1060 = vcmp.gt.f32.partialorder %v1057, %v1059
        %v1061 = vsel %vm1060, 1, 0
        %v1062 = vcvt.s32.f32 %v1061
        %s1063 = scalar_lea.vmem %s206, 96 [#allocation7]
        %1064 = vst [vmem:[%s1063] sm:$0xf] %v1062
        %s1065 = sadd.s32 %s214, 25
        %s1066 = smul.u32 %s1065, 128
        %s1067 = sld [smem:[#allocation2 + %s1066]]
        %v1068 = vstv %s1067
        %v1069 = vmul.f32 %v1068, %v213
        %s1070 = sadd.s32 %s1066, 1
        %s1071 = sld [smem:[#allocation2 + %s1070]]
        %v1072 = vstv %s1071
        %v1073 = vmul.f32 %v1072, %v213
        %1075 = vrot.lane.b32.xlu0 %v1073, 127
        %v1076 = vpop.permute.xlu0 %1075
        %v1077 = vrot.slane %v1076, 4
        %v1078 = vsel %vm227, %v1076, %v1077
        %v1080 = vadd.f32 %v1069, %v1078
        %s1081 = sadd.s32 %s1066, 2
        %s1082 = sld [smem:[#allocation2 + %s1081]]
        %v1083 = vstv %s1082
        %v1084 = vmul.f32 %v1083, %v213
        %1086 = vrot.lane.b32.xlu0 %v1084, 126
        %v1087 = vpop.permute.xlu0 %1086
        %v1088 = vrot.slane %v1087, 4
        %v1089 = vsel %vm239, %v1087, %v1088
        %v1091 = vadd.f32 %v1080, %v1089
        %s1092 = sld [smem:[#allocation5 + %s1065]]
        %v1093 = vstv %s1092
        %vm1094 = vcmp.gt.f32.partialorder %v1091, %v1093
        %v1095 = vsel %vm1094, 1, 0
        %v1096 = vcvt.s32.f32 %v1095
        %s1097 = scalar_lea.vmem %s206, 100 [#allocation7]
        %1098 = vst [vmem:[%s1097] sm:$0xf] %v1096
        %s1099 = sadd.s32 %s214, 26
        %s1100 = smul.u32 %s1099, 128
        %s1101 = sld [smem:[#allocation2 + %s1100]]
        %v1102 = vstv %s1101
        %v1103 = vmul.f32 %v1102, %v213
        %s1104 = sadd.s32 %s1100, 1
        %s1105 = sld [smem:[#allocation2 + %s1104]]
        %v1106 = vstv %s1105
        %v1107 = vmul.f32 %v1106, %v213
        %1109 = vrot.lane.b32.xlu0 %v1107, 127
        %v1110 = vpop.permute.xlu0 %1109
        %v1111 = vrot.slane %v1110, 4
        %v1112 = vsel %vm227, %v1110, %v1111
        %v1114 = vadd.f32 %v1103, %v1112
        %s1115 = sadd.s32 %s1100, 2
        %s1116 = sld [smem:[#allocation2 + %s1115]]
        %v1117 = vstv %s1116
        %v1118 = vmul.f32 %v1117, %v213
        %1120 = vrot.lane.b32.xlu0 %v1118, 126
        %v1121 = vpop.permute.xlu0 %1120
        %v1122 = vrot.slane %v1121, 4
        %v1123 = vsel %vm239, %v1121, %v1122
        %v1125 = vadd.f32 %v1114, %v1123
        %s1126 = sld [smem:[#allocation5 + %s1099]]
        %v1127 = vstv %s1126
        %vm1128 = vcmp.gt.f32.partialorder %v1125, %v1127
        %v1129 = vsel %vm1128, 1, 0
        %v1130 = vcvt.s32.f32 %v1129
        %s1131 = scalar_lea.vmem %s206, 104 [#allocation7]
        %1132 = vst [vmem:[%s1131] sm:$0xf] %v1130
        %s1133 = sadd.s32 %s214, 27
        %s1134 = smul.u32 %s1133, 128
        %s1135 = sld [smem:[#allocation2 + %s1134]]
        %v1136 = vstv %s1135
        %v1137 = vmul.f32 %v1136, %v213
        %s1138 = sadd.s32 %s1134, 1
        %s1139 = sld [smem:[#allocation2 + %s1138]]
        %v1140 = vstv %s1139
        %v1141 = vmul.f32 %v1140, %v213
        %1143 = vrot.lane.b32.xlu0 %v1141, 127
        %v1144 = vpop.permute.xlu0 %1143
        %v1145 = vrot.slane %v1144, 4
        %v1146 = vsel %vm227, %v1144, %v1145
        %v1148 = vadd.f32 %v1137, %v1146
        %s1149 = sadd.s32 %s1134, 2
        %s1150 = sld [smem:[#allocation2 + %s1149]]
        %v1151 = vstv %s1150
        %v1152 = vmul.f32 %v1151, %v213
        %1154 = vrot.lane.b32.xlu0 %v1152, 126
        %v1155 = vpop.permute.xlu0 %1154
        %v1156 = vrot.slane %v1155, 4
        %v1157 = vsel %vm239, %v1155, %v1156
        %v1159 = vadd.f32 %v1148, %v1157
        %s1160 = sld [smem:[#allocation5 + %s1133]]
        %v1161 = vstv %s1160
        %vm1162 = vcmp.gt.f32.partialorder %v1159, %v1161
        %v1163 = vsel %vm1162, 1, 0
        %v1164 = vcvt.s32.f32 %v1163
        %s1165 = scalar_lea.vmem %s206, 108 [#allocation7]
        %1166 = vst [vmem:[%s1165] sm:$0xf] %v1164
        %s1167 = sadd.s32 %s214, 28
        %s1168 = smul.u32 %s1167, 128
        %s1169 = sld [smem:[#allocation2 + %s1168]]
        %v1170 = vstv %s1169
        %v1171 = vmul.f32 %v1170, %v213
        %s1172 = sadd.s32 %s1168, 1
        %s1173 = sld [smem:[#allocation2 + %s1172]]
        %v1174 = vstv %s1173
        %v1175 = vmul.f32 %v1174, %v213
        %1177 = vrot.lane.b32.xlu0 %v1175, 127
        %v1178 = vpop.permute.xlu0 %1177
        %v1179 = vrot.slane %v1178, 4
        %v1180 = vsel %vm227, %v1178, %v1179
        %v1182 = vadd.f32 %v1171, %v1180
        %s1183 = sadd.s32 %s1168, 2
        %s1184 = sld [smem:[#allocation2 + %s1183]]
        %v1185 = vstv %s1184
        %v1186 = vmul.f32 %v1185, %v213
        %1188 = vrot.lane.b32.xlu0 %v1186, 126
        %v1189 = vpop.permute.xlu0 %1188
        %v1190 = vrot.slane %v1189, 4
        %v1191 = vsel %vm239, %v1189, %v1190
        %v1193 = vadd.f32 %v1182, %v1191
        %s1194 = sld [smem:[#allocation5 + %s1167]]
        %v1195 = vstv %s1194
        %vm1196 = vcmp.gt.f32.partialorder %v1193, %v1195
        %v1197 = vsel %vm1196, 1, 0
        %v1198 = vcvt.s32.f32 %v1197
        %s1199 = scalar_lea.vmem %s206, 112 [#allocation7]
        %1200 = vst [vmem:[%s1199] sm:$0xf] %v1198
        %s1201 = sadd.s32 %s214, 29
        %s1202 = smul.u32 %s1201, 128
        %s1203 = sld [smem:[#allocation2 + %s1202]]
        %v1204 = vstv %s1203
        %v1205 = vmul.f32 %v1204, %v213
        %s1206 = sadd.s32 %s1202, 1
        %s1207 = sld [smem:[#allocation2 + %s1206]]
        %v1208 = vstv %s1207
        %v1209 = vmul.f32 %v1208, %v213
        %1211 = vrot.lane.b32.xlu0 %v1209, 127
        %v1212 = vpop.permute.xlu0 %1211
        %v1213 = vrot.slane %v1212, 4
        %v1214 = vsel %vm227, %v1212, %v1213
        %v1216 = vadd.f32 %v1205, %v1214
        %s1217 = sadd.s32 %s1202, 2
        %s1218 = sld [smem:[#allocation2 + %s1217]]
        %v1219 = vstv %s1218
        %v1220 = vmul.f32 %v1219, %v213
        %1222 = vrot.lane.b32.xlu0 %v1220, 126
        %v1223 = vpop.permute.xlu0 %1222
        %v1224 = vrot.slane %v1223, 4
        %v1225 = vsel %vm239, %v1223, %v1224
        %v1227 = vadd.f32 %v1216, %v1225
        %s1228 = sld [smem:[#allocation5 + %s1201]]
        %v1229 = vstv %s1228
        %vm1230 = vcmp.gt.f32.partialorder %v1227, %v1229
        %v1231 = vsel %vm1230, 1, 0
        %v1232 = vcvt.s32.f32 %v1231
        %s1233 = scalar_lea.vmem %s206, 116 [#allocation7]
        %1234 = vst [vmem:[%s1233] sm:$0xf] %v1232
        %s1235 = sadd.s32 %s214, 30
        %s1236 = smul.u32 %s1235, 128
        %s1237 = sld [smem:[#allocation2 + %s1236]]
        %v1238 = vstv %s1237
        %v1239 = vmul.f32 %v1238, %v213
        %s1240 = sadd.s32 %s1236, 1
        %s1241 = sld [smem:[#allocation2 + %s1240]]
        %v1242 = vstv %s1241
        %v1243 = vmul.f32 %v1242, %v213
        %1245 = vrot.lane.b32.xlu0 %v1243, 127
        %v1246 = vpop.permute.xlu0 %1245
        %v1247 = vrot.slane %v1246, 4
        %v1248 = vsel %vm227, %v1246, %v1247
        %v1250 = vadd.f32 %v1239, %v1248
        %s1251 = sadd.s32 %s1236, 2
        %s1252 = sld [smem:[#allocation2 + %s1251]]
        %v1253 = vstv %s1252
        %v1254 = vmul.f32 %v1253, %v213
        %1256 = vrot.lane.b32.xlu0 %v1254, 126
        %v1257 = vpop.permute.xlu0 %1256
        %v1258 = vrot.slane %v1257, 4
        %v1259 = vsel %vm239, %v1257, %v1258
        %v1261 = vadd.f32 %v1250, %v1259
        %s1262 = sld [smem:[#allocation5 + %s1235]]
        %v1263 = vstv %s1262
        %vm1264 = vcmp.gt.f32.partialorder %v1261, %v1263
        %v1265 = vsel %vm1264, 1, 0
        %v1266 = vcvt.s32.f32 %v1265
        %s1267 = scalar_lea.vmem %s206, 120 [#allocation7]
        %1268 = vst [vmem:[%s1267] sm:$0xf] %v1266
        %s1269 = sadd.s32 %s214, 31
        %s1270 = smul.u32 %s1269, 128
        %s1271 = sld [smem:[#allocation2 + %s1270]]
        %v1272 = vstv %s1271
        %v1273 = vmul.f32 %v1272, %v213
        %s1274 = sadd.s32 %s1270, 1
        %s1275 = sld [smem:[#allocation2 + %s1274]]
        %v1276 = vstv %s1275
        %v1277 = vmul.f32 %v1276, %v213
        %1279 = vrot.lane.b32.xlu0 %v1277, 127
        %v1280 = vpop.permute.xlu0 %1279
        %v1281 = vrot.slane %v1280, 4
        %v1282 = vsel %vm227, %v1280, %v1281
        %v1284 = vadd.f32 %v1273, %v1282
        %s1285 = sadd.s32 %s1270, 2
        %s1286 = sld [smem:[#allocation2 + %s1285]]
        %v1287 = vstv %s1286
        %v1288 = vmul.f32 %v1287, %v213
        %1290 = vrot.lane.b32.xlu0 %v1288, 126
        %v1291 = vpop.permute.xlu0 %1290
        %v1292 = vrot.slane %v1291, 4
        %v1293 = vsel %vm239, %v1291, %v1292
        %v1295 = vadd.f32 %v1284, %v1293
        %s1296 = sld [smem:[#allocation5 + %s1269]]
        %v1297 = vstv %s1296
        %vm1298 = vcmp.gt.f32.partialorder %v1295, %v1297
        %v1299 = vsel %vm1298, 1, 0
        %v1300 = vcvt.s32.f32 %v1299
        %s1301 = scalar_lea.vmem %s206, 124 [#allocation7]
        %1302 = vst [vmem:[%s1301] sm:$0xf] %v1300
        %s1303 = sand.u32 %s109, 1
        %s1304 = scalar_lea.sflag [#allocation3], %s1303
        %s1305 = sand.u32 %s109, 1
        %s1306 = smul.addr %s1305, 128
        %s1307 = scalar_lea.vmem [#allocation7], %s1306
        // Predicated region
        $region41: #{tpu_custom_call.1} parent=31 // pred_check
          %p1308 = pneg %p119
        $region42: #{tpu_custom_call.1} parent=31 // pred_check_branch
          %1310 = sbr.rel (%p1308) target = $region44
        $region43: #{tpu_custom_call.1} parent=31 // pred_region
          %s1311 = smul.u32 32, %s24
          %1313 = vsyncadd %s1304, 0
          %s1314 = smul.addr %s23, 32
          %s1315 = sadd.s32 %s1311, %s1314
          %s1316 = smul.addr %s1315, 4
          %s1317 = scalar_lea.hbm %s3, %s1316
          %s1318 = sshll.u32 %s1307, 4
          %s1319 = int_to_ptr.vmem [resolvable:$true] %s1318
          %s1320 = sshll.u32 %s1317, 4
          %s1321 = int_to_ptr.hbm [resolvable:$true] %s1320
          %1326 = dma.vmem_to_hbm [thread:$0]  %s1319, 2048, %s1321, %s1304, 64, 64, 4
        $region44: #{tpu_custom_call.1} parent=31 // pred_fallthru
          _
      $region32: #{tpu_custom_call.1} parent=5 // pred_fallthru
        _
      %p1327 = scmp.le.s32.totalorder 2, %s14
      // Predicated region
      $region45: #{tpu_custom_call.1} parent=5 // pred_check
        %p1328 = pneg %p1327
      $region46: #{tpu_custom_call.1} parent=5 // pred_check_branch
        %1330 = sbr.rel (%p1328) target = $region48
      $region47: #{tpu_custom_call.1} parent=5 // pred_region
        %s1331 = ssub.s32 %s14, 2
        // Predicated region
        $region49: #{tpu_custom_call.1} parent=47 // pred_check
          %p1332 = pneg %p125
        $region50: #{tpu_custom_call.1} parent=47 // pred_check_branch
          %1334 = sbr.rel (%p1332) target = $region52
        $region51: #{tpu_custom_call.1} parent=47 // pred_region
          %s1335 = sand.u32 %s110, 1
          %s1336 = scalar_lea.sflag [#allocation3], %s1335
          %s1337 = sand.u32 %s110, 1
          %s1338 = smul.addr %s1337, 128
          %s1339 = scalar_lea.vmem [#allocation7], %s1338
          %1341 = dma.done %s1336, 2048
        $region52: #{tpu_custom_call.1} parent=47 // pred_fallthru
          _
      $region48: #{tpu_custom_call.1} parent=5 // pred_fallthru
        _
    $region6: #{tpu_custom_call.1} parent=1 // loop_footer
      %s18 = sadd.s32 1, %s14
    $region7: #{tpu_custom_call.1} parent=1 // loop_footer_branch
      %13 = sbr.rel target = $region3
    $region8: #{tpu_custom_call.1} parent=1 // loop_exit
      _
    %1342 = vsyncpa [#allocation3], 1
    %s1343 = scalar_lea.sflag [#allocation3], 1
    %1344 = vsyncpa %s1343, 1
    %1345 = vsyncpa [#allocation4], 1
    %s1346 = scalar_lea.sflag [#allocation4], 1
    %1347 = vsyncpa %s1346, 1
    %1348 = vsyncpa [#allocation6], 1

</llo_original>
